<compile_context>
chip_gen: v7x
topology: tpu7x:2x2x1
jax: 0.10.0
libtpu: 0.0.40
codegen_flags: <defaults>
</compile_context>

<pallas_src>
import jax
import jax.numpy as jnp
from jax.experimental import pallas as pl
from jax.experimental.pallas import tpu as pltpu

HIDDEN = 512
OUT = 784            # 28 * 28 -- written unpadded
TB_MAX = 1024        # batch-tile cap; ~15 MiB working set incl. double-buffered out


def decoder_kernel(z_ref, w1_ref, b1_ref, w2_ref, b2_ref, out_ref):
    # Hidden layer: (TB, L) @ (L, 512) on the MXU, f32 accumulation.
    z = z_ref[...].astype(jnp.bfloat16)
    h = jnp.dot(z, w1_ref[...], preferred_element_type=jnp.float32)
    h = jnp.maximum(h + b1_ref[...], 0.0)

    # Output layer: (TB, 512) @ (512, 784), f32 accumulation, bias in f32.
    y = jnp.dot(h.astype(jnp.bfloat16), w2_ref[...],
                preferred_element_type=jnp.float32) + b2_ref[...]

    # Sigmoid via EUP-only ops: exp + approx reciprocal (both off the VPU slot).
    # Clamp keeps exp finite; sigmoid is fully saturated at |y| = 30 anyway.
    y = jnp.clip(y, -30.0, 30.0)
    e = jnp.exp(-y)
    out_ref[...] = pl.reciprocal(1.0 + e, approx=True).astype(out_ref.dtype)


def _round_up(x, m):
    return ((x + m - 1) // m) * m


def _choose_batch_tile(B):
    """Pick the batch tile.

    Big enough to amortize the ~0.35us per-grid-step overhead, but mid-size
    batches are split into >=2 tiles so the 'parallel' grid axis actually
    shards across both TensorCores on v7x.
    """
    if B <= 16:
        return max(8, _round_up(B, 8))
    return min(TB_MAX, _round_up(pl.cdiv(B, 2), 8))


def _resident_spec(shape):
    # Constant index_map + single buffering: fetched once, held in VMEM.
    return pl.BlockSpec(shape, lambda i: (0, 0), pipeline_mode=pl.Buffered(1))


def decoder_forward(z, w1, b1, w2, b2, *, out_dtype=jnp.float32):
    """z: (B, latent) float32 -> (B, 1, 28, 28) out_dtype.

    w1: (latent, 512) bf16, b1: (1, 512) f32,
    w2: (512, 784) bf16,    b2: (1, 784) f32.
    Pass out_dtype=jnp.bfloat16 to halve output HBM writes if downstream allows.
    """
    B, L = z.shape

    TB = _choose_batch_tile(B)
    B_pad = pl.cdiv(B, TB) * TB
    if B_pad != B:
        z = jnp.pad(z, ((0, B_pad - B), (0, 0)))

    grid = (B_pad // TB,)

    out_bytes = jnp.dtype(out_dtype).itemsize
    cost = pl.CostEstimate(
        flops=2 * B_pad * (L * HIDDEN + HIDDEN * OUT),
        transcendentals=2 * B_pad * OUT,  # exp + reciprocal
        bytes_accessed=(z.size * 4 + w1.size * 2 + b1.size * 4
                        + w2.size * 2 + b2.size * 4 + B_pad * OUT * out_bytes),
    )

    out_flat = pl.pallas_call(
        decoder_kernel,
        out_shape=jax.ShapeDtypeStruct((B_pad, OUT), out_dtype),
        grid=grid,
        in_specs=[
            pl.BlockSpec((TB, L), lambda i: (i, 0)),  # z: streamed per batch tile
            _resident_spec(w1.shape),                 # weights / biases:
            _resident_spec(b1.shape),                 # VMEM-resident,
            _resident_spec(w2.shape),                 # single-buffered
            _resident_spec(b2.shape),
        ],
        out_specs=pl.BlockSpec((TB, OUT), lambda i: (i, 0)),
        compiler_params=pltpu.CompilerParams(
            dimension_semantics=("parallel",),
            vmem_limit_bytes=48 * 1024 * 1024,
        ),
        cost_estimate=cost,
    )(z, w1, b1, w2, b2)

    # Output is produced at exactly 784 columns -> no column-slice copy.  Only a
    # row slice when the batch had to be padded; the NCHW reshape is metadata.
    if B_pad != B:
        out_flat = out_flat[:B]
    return out_flat.reshape((-1, 1, 28, 28))


def init_params(key, latent_dims):
    """Deterministic init mimicking nn.Linear's U(-1/sqrt(fan_in), 1/sqrt(fan_in)).

    Weights stored (in, out) and cast to bf16; no output-dim padding.
    """
    k1, k2, k3, k4 = jax.random.split(key, 4)
    bound1 = 1.0 / jnp.sqrt(latent_dims)
    bound2 = 1.0 / jnp.sqrt(float(HIDDEN))
    w1 = jax.random.uniform(k1, (latent_dims, HIDDEN), jnp.float32, -bound1, bound1)
    b1 = jax.random.uniform(k2, (1, HIDDEN), jnp.float32, -bound1, bound1)
    w2 = jax.random.uniform(k3, (HIDDEN, OUT), jnp.float32, -bound2, bound2)
    b2 = jax.random.uniform(k4, (1, OUT), jnp.float32, -bound2, bound2)
    return w1.astype(jnp.bfloat16), b1, w2.astype(jnp.bfloat16), b2


if __name__ == "__main__":
    latent_dims = 8
    batch = 2

    key = jax.random.PRNGKey(0)
    kz, kp = jax.random.split(key)
    z = jax.random.normal(kz, (batch, latent_dims), jnp.float32)
    w1, b1, w2, b2 = init_params(kp, latent_dims)

    out = decoder_forward(z, w1, b1, w2, b2)
    jax.block_until_ready(out)

    # Reference in plain JAX, mirroring the kernel's bf16 matmul inputs / f32
    # accumulation.  The in-kernel approx reciprocal is good to ~1e-4 absolute.
    zb = z.astype(jnp.bfloat16)
    h_ref = jnp.maximum(
        jnp.dot(zb, w1, preferred_element_type=jnp.float32) + b1, 0.0)
    y_ref = jnp.dot(h_ref.astype(jnp.bfloat16), w2,
                    preferred_element_type=jnp.float32) + b2
    ref = jax.nn.sigmoid(y_ref).reshape((-1, 1, 28, 28))

    assert out.shape == (batch, 1, 28, 28), out.shape
    assert jnp.allclose(out, ref, atol=2e-3), "mismatch vs reference"

    print("KERNEL_OK")
</pallas_src>

<mosaic_0001>
module attributes {stable_mosaic.version = 11 : i64} {
  func.func @decoder_kernel(%arg0: i32, %arg1: memref<8x8xf32, #tpu.memory_space<vmem>>, %arg2: memref<8x512xbf16, #tpu.memory_space<vmem>>, %arg3: memref<1x512xf32, #tpu.memory_space<vmem>>, %arg4: memref<512x784xbf16, #tpu.memory_space<vmem>>, %arg5: memref<1x784xf32, #tpu.memory_space<vmem>>, %arg6: memref<8x784xf32, #tpu.memory_space<vmem>>) attributes {dimension_semantics = [#tpu.dimension_semantics<parallel>], iteration_bounds = array<i64: 1>, scalar_prefetch = 0 : i64, scratch_operands = 0 : i64, tpu.core_type = #tpu.core_type<tc>, window_params = [{transform_indices = @transform_0, window_bounds = array<i64: 8, 8>}, {pipeline_mode = #tpu.pipeline_mode<synchronous>, transform_indices = @transform_1, window_bounds = array<i64: 8, 512>}, {pipeline_mode = #tpu.pipeline_mode<synchronous>, transform_indices = @transform_2, window_bounds = array<i64: 1, 512>}, {pipeline_mode = #tpu.pipeline_mode<synchronous>, transform_indices = @transform_3, window_bounds = array<i64: 512, 784>}, {pipeline_mode = #tpu.pipeline_mode<synchronous>, transform_indices = @transform_4, window_bounds = array<i64: 1, 784>}, {transform_indices = @transform_5, window_bounds = array<i64: 8, 784>}]} {
    %c0 = arith.constant 0 : index
    %c0_0 = arith.constant 0 : index
    %0 = vector.load %arg1[%c0, %c0_0] : memref<8x8xf32, #tpu.memory_space<vmem>>, vector<8x8xf32>
    %1 = arith.truncf %0 : vector<8x8xf32> to vector<8x8xbf16>
    %c0_1 = arith.constant 0 : index
    %c0_2 = arith.constant 0 : index
    %2 = vector.load %arg2[%c0_1, %c0_2] : memref<8x512xbf16, #tpu.memory_space<vmem>>, vector<8x512xbf16>
    %cst = arith.constant dense<0.000000e+00> : vector<8x512xf32>
    %3 = tpu.matmul %1, %2, %cst {dimension_numbers = #tpu.dot_dimension_numbers<[1], [0], [0], [1], [0, 0, 1, 1], [], []>} : vector<8x8xbf16>, vector<8x512xbf16>, vector<8x512xf32> -> vector<8x512xf32>
    %c0_3 = arith.constant 0 : index
    %c0_4 = arith.constant 0 : index
    %4 = vector.load %arg3[%c0_3, %c0_4] : memref<1x512xf32, #tpu.memory_space<vmem>>, vector<1x512xf32>
    %5 = vector.broadcast %4 : vector<1x512xf32> to vector<8x512xf32>
    %6 = arith.addf %3, %5 : vector<8x512xf32>
    %cst_5 = arith.constant 0.000000e+00 : f32
    %7 = vector.broadcast %cst_5 : f32 to vector<8x512xf32>
    %8 = arith.maximumf %6, %7 : vector<8x512xf32>
    %9 = arith.truncf %8 : vector<8x512xf32> to vector<8x512xbf16>
    %c0_6 = arith.constant 0 : index
    %c0_7 = arith.constant 0 : index
    %10 = vector.load %arg4[%c0_6, %c0_7] : memref<512x784xbf16, #tpu.memory_space<vmem>>, vector<512x784xbf16>
    %cst_8 = arith.constant dense<0.000000e+00> : vector<8x784xf32>
    %11 = tpu.matmul %9, %10, %cst_8 {dimension_numbers = #tpu.dot_dimension_numbers<[1], [0], [0], [1], [0, 0, 1, 1], [], []>} : vector<8x512xbf16>, vector<512x784xbf16>, vector<8x784xf32> -> vector<8x784xf32>
    %c0_9 = arith.constant 0 : index
    %c0_10 = arith.constant 0 : index
    %12 = vector.load %arg5[%c0_9, %c0_10] : memref<1x784xf32, #tpu.memory_space<vmem>>, vector<1x784xf32>
    %13 = vector.broadcast %12 : vector<1x784xf32> to vector<8x784xf32>
    %14 = arith.addf %11, %13 : vector<8x784xf32>
    %cst_11 = arith.constant -3.000000e+01 : f32
    %cst_12 = arith.constant 3.000000e+01 : f32
    %15 = vector.broadcast %cst_11 : f32 to vector<8x784xf32>
    %16 = arith.maximumf %15, %14 : vector<8x784xf32>
    %17 = vector.broadcast %cst_12 : f32 to vector<8x784xf32>
    %18 = arith.minimumf %17, %16 : vector<8x784xf32>
    %cst_13 = arith.constant 0.000000e+00 : f32
    %19 = vector.broadcast %cst_13 : f32 to vector<8x784xf32>
    %20 = arith.subf %19, %18 : vector<8x784xf32>
    %21 = math.exp %20 : vector<8x784xf32>
    %cst_14 = arith.constant 1.000000e+00 : f32
    %22 = vector.broadcast %cst_14 : f32 to vector<8x784xf32>
    %23 = arith.addf %22, %21 : vector<8x784xf32>
    %24 = tpu.reciprocal %23 {approx = true} : vector<8x784xf32> -> vector<8x784xf32>
    %c0_15 = arith.constant 0 : index
    %c0_16 = arith.constant 0 : index
    %25 = vector.load %arg6[%c0_15, %c0_16] : memref<8x784xf32, #tpu.memory_space<vmem>>, vector<8x784xf32>
    tpu.vector_store %arg6[%c0_15, %c0_16], %24 {strides = array<i32>} : memref<8x784xf32, #tpu.memory_space<vmem>>, vector<8x784xf32>,
    return
  }
  func.func @transform_0(%arg0: i32) -> (i32, i32) {
    %c0_i32 = arith.constant 0 : i32
    %c0_i32_0 = arith.constant 0 : i32
    return %arg0, %c0_i32 : i32, i32
  }
  func.func @transform_1(%arg0: i32) -> (i32, i32) {
    %c0_i32 = arith.constant 0 : i32
    %c0_i32_0 = arith.constant 0 : i32
    %c0_i32_1 = arith.constant 0 : i32
    return %c0_i32, %c0_i32_0 : i32, i32
  }
  func.func @transform_2(%arg0: i32) -> (i32, i32) {
    %c0_i32 = arith.constant 0 : i32
    %c0_i32_0 = arith.constant 0 : i32
    %c0_i32_1 = arith.constant 0 : i32
    return %c0_i32, %c0_i32_0 : i32, i32
  }
  func.func @transform_3(%arg0: i32) -> (i32, i32) {
    %c0_i32 = arith.constant 0 : i32
    %c0_i32_0 = arith.constant 0 : i32
    %c0_i32_1 = arith.constant 0 : i32
    return %c0_i32, %c0_i32_0 : i32, i32
  }
  func.func @transform_4(%arg0: i32) -> (i32, i32) {
    %c0_i32 = arith.constant 0 : i32
    %c0_i32_0 = arith.constant 0 : i32
    %c0_i32_1 = arith.constant 0 : i32
    return %c0_i32, %c0_i32_0 : i32, i32
  }
  func.func @transform_5(%arg0: i32) -> (i32, i32) {
    %c0_i32 = arith.constant 0 : i32
    %c0_i32_0 = arith.constant 0 : i32
    return %arg0, %c0_i32 : i32, i32
  }
}

</mosaic_0001>

<llo_original>
// kernel: tpu_custom_call.1
$region0: #{tpu_custom_call.1}
  #allocation0 [shape = 'u32[]', space=smem, size = 0x4, offset = 0x4, fixed_abs, tag = 'smem constant byte address 0x4 - core index']
  #allocation1 [shape = 'u32[144,128]{1,0:T(1,128)}', space=vmem, size = 0x12000, scoped, tag = 'internal scratch']
  %s0 = inlined_call_operand.vmem [shape: f32[8,8], index: 0, kind: input, shape index: {}]
  %s1 = inlined_call_operand.vmem [shape: bf16[8,512], index: 1, kind: input, shape index: {}]
  %s2 = inlined_call_operand.vmem [shape: f32[1,512], index: 2, kind: input, shape index: {}]
  %s3 = inlined_call_operand.vmem [shape: bf16[512,784], index: 3, kind: input, shape index: {}]
  %s4 = inlined_call_operand.vmem [shape: f32[1,784], index: 4, kind: input, shape index: {}]
  %s5 = inlined_call_operand.hbm [shape: f32[8,784], index: 5, kind: output, shape index: {}]
  %s6 = sld [smem:[#allocation0]]
  $region30: #{tpu_custom_call.1} parent=0
    _
  %s8 = ssub.s32 1, %s6
  %s9 = scalar_select 0, %s8, %s6
  $region1: #{tpu_custom_call.1} parent=0
    #allocation2 [shape = 'u8[28672]{0}', space=vmem, size = 0x7000, scoped, tag = 'output window, operand 0, single buffered']
    #allocation3 [shape = 's32[1]{0}', space=sflag, size = 0x4, scoped, tag = 'scoped memory for tpu_custom_call.1']
    %10 = vsyncpa [#allocation3], 0
    // Predicated region
    $region2: #{tpu_custom_call.1} parent=1 // pred_check
      _
    $region3: #{tpu_custom_call.1} parent=1 // pred_check_branch
      %12 = sbr.rel (0) target = $region5
    $region4: #{tpu_custom_call.1} parent=1 // pred_region
      _
    $region5: #{tpu_custom_call.1} parent=1 // pred_fallthru
      _
    // Predicated region
    $region6: #{tpu_custom_call.1} parent=1 // pred_check
      _
    $region7: #{tpu_custom_call.1} parent=1 // pred_check_branch
      %14 = sbr.rel (0) target = $region9
    $region8: #{tpu_custom_call.1} parent=1 // pred_region
      _
    $region9: #{tpu_custom_call.1} parent=1 // pred_fallthru
      _
    // Predicated region
    $region10: #{tpu_custom_call.1} parent=1 // pred_check
      _
    $region11: #{tpu_custom_call.1} parent=1 // pred_check_branch
      %16 = sbr.rel (0) target = $region13
    $region12: #{tpu_custom_call.1} parent=1 // pred_region
      _
    $region13: #{tpu_custom_call.1} parent=1 // pred_fallthru
      _
    // Predicated region
    $region14: #{tpu_custom_call.1} parent=1 // pred_check
      _
    $region15: #{tpu_custom_call.1} parent=1 // pred_check_branch
      %18 = sbr.rel (0) target = $region17
    $region16: #{tpu_custom_call.1} parent=1 // pred_region
      _
    $region17: #{tpu_custom_call.1} parent=1 // pred_fallthru
      _
    // Predicated region
    $region18: #{tpu_custom_call.1} parent=1 // pred_check
      _
    $region19: #{tpu_custom_call.1} parent=1 // pred_check_branch
      %20 = sbr.rel (0) target = $region21
    $region20: #{tpu_custom_call.1} parent=1 // pred_region
      _
    $region21: #{tpu_custom_call.1} parent=1 // pred_fallthru
      _
    %v22 = vld [vmem:[%s0] sm:$0xff]
    %v23 = vpack.c.bf16 %v22, %v22
    %v24 = vld [vmem:[%s1] sm:$0xff]
    %v25 = vld [vmem:[%s1 + $0x8] sm:$0xff]
    %v26 = vld [vmem:[%s2] sm:$0xf]
    %v28 = vlaneseq
    %v29 = vshrl.u32 %v28, 7
    %v30 = vsub.s32 0, %v29
    %v31 = vrot.slane %v26, %v30
    %v32 = vlaneseq
    %v33 = vshrl.u32 %v32, 7
    %v34 = vsub.s32 1, %v33
    %v35 = vrot.slane %v26, %v34
    %v36 = vlaneseq
    %v37 = vshrl.u32 %v36, 7
    %v38 = vsub.s32 2, %v37
    %v39 = vrot.slane %v26, %v38
    %v40 = vlaneseq
    %v41 = vshrl.u32 %v40, 7
    %v42 = vsub.s32 3, %v41
    %v43 = vrot.slane %v26, %v42
    %v50 = vunpack.c.l.b16 %v24
    %v51 = vunpack.c.h.b16 %v24
    %v52 = vunpack.c.l.b16 %v25
    %v53 = vunpack.c.h.b16 %v25
    %v54 = vpack.c.b16 %v50, %v50
    %v55 = vpack.c.b16 %v51, %v51
    %v56 = vpack.c.b16 %v52, %v52
    %v57 = vpack.c.b16 %v53, %v53
    %vm58 = vcmask 64512
    %v60 = vsel %vm58, %v23, 0
    %vm62 = vcmask 1043456
    %v64 = vsel %vm62, %v54, 0
    %v67 = vsel %vm62, %v55, 0
    %v70 = vsel %vm62, %v56, 0
    %v73 = vsel %vm62, %v57, 0
    %75 = vmatprep.subr.bf16.mxu0 %v67
    %76 = vmatpush1.bf16.msra.mxu0 %v64
    %77 = vmatprep.subr.bf16.mxu0 0
    %78 = vmatpush1.bf16.msra.mxu0 0
    %79 = vmatprep.subr.bf16.mxu0 0
    %80 = vmatpush1.bf16.msra.mxu0 0
    %81 = vmatprep.subr.bf16.mxu0 0
    %82 = vmatpush1.bf16.msra.mxu0 0
    %83 = vmatprep.subr.bf16.mxu0 0
    %84 = vmatpush1.bf16.msra.mxu0 0
    %85 = vmatprep.subr.bf16.mxu0 0
    %86 = vmatpush1.bf16.msra.mxu0 0
    %87 = vmatprep.subr.bf16.mxu0 0
    %88 = vmatpush1.bf16.msra.mxu0 0
    %89 = vmatprep.subr.bf16.mxu0 0
    %90 = vmatpush1.bf16.msra.mxu0 0
    %91 = vmatprep.subr.bf16.mxu0 0
    %92 = vmatpush1.bf16.msra.mxu0 0
    %93 = vmatprep.subr.bf16.mxu0 0
    %94 = vmatpush1.bf16.msra.mxu0 0
    %95 = vmatprep.subr.bf16.mxu0 0
    %96 = vmatpush1.bf16.msra.mxu0 0
    %97 = vmatprep.subr.bf16.mxu0 0
    %98 = vmatpush1.bf16.msra.mxu0 0
    %99 = vmatprep.subr.bf16.mxu0 0
    %100 = vmatpush1.bf16.msra.mxu0 0
    %101 = vmatprep.subr.bf16.mxu0 0
    %102 = vmatpush1.bf16.msra.mxu0 0
    %103 = vmatprep.subr.bf16.mxu0 0
    %104 = vmatpush1.bf16.msra.mxu0 0
    %105 = vmatprep.subr.bf16.mxu0 0
    %106 = vmatpush1.bf16.msra.mxu0 0
    %107 = vmatprep.mubr.bf16.mxu0 0
    %108 = vmatmul.mubr.bf16.gmra.mrb[0].mxu0 %v60
    %v109 = vpop.f32.mrb[0].mxu0
    %v110 = vadd.f32 %v31, %v109
    %v111 = vpop.f32.mrb[0].mxu0
    %v112 = vadd.f32 %v35, %v111
    %v113 = vpop.f32.mrb[0].mxu0
    %v114 = vpop.f32.mrb[0].mxu0
    %115 = vdwg.mxu0
    %116 = vmatprep.subr.bf16.mxu0 %v73
    %117 = vmatpush1.bf16.msra.mxu0 %v70
    %118 = vmatprep.subr.bf16.mxu0 0
    %119 = vmatpush1.bf16.msra.mxu0 0
    %120 = vmatprep.subr.bf16.mxu0 0
    %121 = vmatpush1.bf16.msra.mxu0 0
    %122 = vmatprep.subr.bf16.mxu0 0
    %123 = vmatpush1.bf16.msra.mxu0 0
    %124 = vmatprep.subr.bf16.mxu0 0
    %125 = vmatpush1.bf16.msra.mxu0 0
    %126 = vmatprep.subr.bf16.mxu0 0
    %127 = vmatpush1.bf16.msra.mxu0 0
    %128 = vmatprep.subr.bf16.mxu0 0
    %129 = vmatpush1.bf16.msra.mxu0 0
    %130 = vmatprep.subr.bf16.mxu0 0
    %131 = vmatpush1.bf16.msra.mxu0 0
    %132 = vmatprep.subr.bf16.mxu0 0
    %133 = vmatpush1.bf16.msra.mxu0 0
    %134 = vmatprep.subr.bf16.mxu0 0
    %135 = vmatpush1.bf16.msra.mxu0 0
    %136 = vmatprep.subr.bf16.mxu0 0
    %137 = vmatpush1.bf16.msra.mxu0 0
    %138 = vmatprep.subr.bf16.mxu0 0
    %139 = vmatpush1.bf16.msra.mxu0 0
    %140 = vmatprep.subr.bf16.mxu0 0
    %141 = vmatpush1.bf16.msra.mxu0 0
    %142 = vmatprep.subr.bf16.mxu0 0
    %143 = vmatpush1.bf16.msra.mxu0 0
    %144 = vmatprep.subr.bf16.mxu0 0
    %145 = vmatpush1.bf16.msra.mxu0 0
    %146 = vmatprep.subr.bf16.mxu0 0
    %147 = vmatpush1.bf16.msra.mxu0 0
    %148 = vmatprep.mubr.bf16.mxu0 0
    %149 = vmatmul.mubr.bf16.gmra.mrb[0].mxu0 %v60
    %v150 = vpop.f32.mrb[0].mxu0
    %v151 = vadd.f32 %v39, %v150
    %v152 = vpop.f32.mrb[0].mxu0
    %v153 = vadd.f32 %v43, %v152
    %v154 = vpop.f32.mrb[0].mxu0
    %v155 = vpop.f32.mrb[0].mxu0
    %156 = vdwg.mxu0
    %v157 = vmax.f32 %v110, 0.0
    %v158 = vmax.f32 %v112, 0.0
    %v159 = vmax.f32 %v151, 0.0
    %v160 = vmax.f32 %v153, 0.0
    %v161 = vpack.c.bf16 %v157, %v157
    %v162 = vpack.c.bf16 %v158, %v158
    %v163 = vpack.c.bf16 %v159, %v159
    %v164 = vpack.c.bf16 %v160, %v160
    %v165 = vld [vmem:[%s3] sm:$0xff]
    %v166 = vld [vmem:[%s3 + $0x8] sm:$0xff]
    %v167 = vld [vmem:[%s3 + $0x10] sm:$0xff]
    %v168 = vld [vmem:[%s3 + $0x18] sm:$0xf]
    %v169 = vld [vmem:[%s3 + $0x1c] sm:$0xff]
    %v170 = vld [vmem:[%s3 + $0x24] sm:$0xff]
    %v171 = vld [vmem:[%s3 + $0x2c] sm:$0xff]
    %v172 = vld [vmem:[%s3 + $0x34] sm:$0xf]
    %v173 = vld [vmem:[%s3 + $0x38] sm:$0xff]
    %v174 = vld [vmem:[%s3 + $0x40] sm:$0xff]
    %v175 = vld [vmem:[%s3 + $0x48] sm:$0xff]
    %v176 = vld [vmem:[%s3 + $0x50] sm:$0xf]
    %v177 = vld [vmem:[%s3 + $0x54] sm:$0xff]
    %v178 = vld [vmem:[%s3 + $0x5c] sm:$0xff]
    %v179 = vld [vmem:[%s3 + $0x64] sm:$0xff]
    %v180 = vld [vmem:[%s3 + $0x6c] sm:$0xf]
    %v181 = vld [vmem:[%s3 + $0x70] sm:$0xff]
    %v182 = vld [vmem:[%s3 + $0x78] sm:$0xff]
    %v183 = vld [vmem:[%s3 + $0x80] sm:$0xff]
    %v184 = vld [vmem:[%s3 + $0x88] sm:$0xf]
    %v185 = vld [vmem:[%s3 + $0x8c] sm:$0xff]
    %v186 = vld [vmem:[%s3 + $0x94] sm:$0xff]
    %v187 = vld [vmem:[%s3 + $0x9c] sm:$0xff]
    %v188 = vld [vmem:[%s3 + $0xa4] sm:$0xf]
    %v189 = vld [vmem:[%s3 + $0xa8] sm:$0xff]
    %v190 = vld [vmem:[%s3 + $0xb0] sm:$0xff]
    %v191 = vld [vmem:[%s3 + $0xb8] sm:$0xff]
    %v192 = vld [vmem:[%s3 + $0xc0] sm:$0xf]
    %v193 = vld [vmem:[%s3 + $0xc4] sm:$0xff]
    %v194 = vld [vmem:[%s3 + $0xcc] sm:$0xff]
    %v195 = vld [vmem:[%s3 + $0xd4] sm:$0xff]
    %v196 = vld [vmem:[%s3 + $0xdc] sm:$0xf]
    %v197 = vld [vmem:[%s3 + $0xe0] sm:$0xff]
    %v198 = vld [vmem:[%s3 + $0xe8] sm:$0xff]
    %v199 = vld [vmem:[%s3 + $0xf0] sm:$0xff]
    %v200 = vld [vmem:[%s3 + $0xf8] sm:$0xf]
    %v201 = vld [vmem:[%s3 + $0xfc] sm:$0xff]
    %v202 = vld [vmem:[%s3 + $0x104] sm:$0xff]
    %v203 = vld [vmem:[%s3 + $0x10c] sm:$0xff]
    %v204 = vld [vmem:[%s3 + $0x114] sm:$0xf]
    %v205 = vld [vmem:[%s3 + $0x118] sm:$0xff]
    %v206 = vld [vmem:[%s3 + $0x120] sm:$0xff]
    %v207 = vld [vmem:[%s3 + $0x128] sm:$0xff]
    %v208 = vld [vmem:[%s3 + $0x130] sm:$0xf]
    %v209 = vld [vmem:[%s3 + $0x134] sm:$0xff]
    %v210 = vld [vmem:[%s3 + $0x13c] sm:$0xff]
    %v211 = vld [vmem:[%s3 + $0x144] sm:$0xff]
    %v212 = vld [vmem:[%s3 + $0x14c] sm:$0xf]
    %v213 = vld [vmem:[%s3 + $0x150] sm:$0xff]
    %v214 = vld [vmem:[%s3 + $0x158] sm:$0xff]
    %v215 = vld [vmem:[%s3 + $0x160] sm:$0xff]
    %v216 = vld [vmem:[%s3 + $0x168] sm:$0xf]
    %v217 = vld [vmem:[%s3 + $0x16c] sm:$0xff]
    %v218 = vld [vmem:[%s3 + $0x174] sm:$0xff]
    %v219 = vld [vmem:[%s3 + $0x17c] sm:$0xff]
    %v220 = vld [vmem:[%s3 + $0x184] sm:$0xf]
    %v221 = vld [vmem:[%s3 + $0x188] sm:$0xff]
    %v222 = vld [vmem:[%s3 + $0x190] sm:$0xff]
    %v223 = vld [vmem:[%s3 + $0x198] sm:$0xff]
    %v224 = vld [vmem:[%s3 + $0x1a0] sm:$0xf]
    %v225 = vld [vmem:[%s3 + $0x1a4] sm:$0xff]
    %v226 = vld [vmem:[%s3 + $0x1ac] sm:$0xff]
    %v227 = vld [vmem:[%s3 + $0x1b4] sm:$0xff]
    %v228 = vld [vmem:[%s3 + $0x1bc] sm:$0xf]
    %v229 = vld [vmem:[%s3 + $0x1c0] sm:$0xff]
    %v230 = vld [vmem:[%s3 + $0x1c8] sm:$0xff]
    %v231 = vld [vmem:[%s3 + $0x1d0] sm:$0xff]
    %v232 = vld [vmem:[%s3 + $0x1d8] sm:$0xf]
    %v233 = vld [vmem:[%s3 + $0x1dc] sm:$0xff]
    %v234 = vld [vmem:[%s3 + $0x1e4] sm:$0xff]
    %v235 = vld [vmem:[%s3 + $0x1ec] sm:$0xff]
    %v236 = vld [vmem:[%s3 + $0x1f4] sm:$0xf]
    %v237 = vld [vmem:[%s3 + $0x1f8] sm:$0xff]
    %v238 = vld [vmem:[%s3 + $0x200] sm:$0xff]
    %v239 = vld [vmem:[%s3 + $0x208] sm:$0xff]
    %v240 = vld [vmem:[%s3 + $0x210] sm:$0xf]
    %v241 = vld [vmem:[%s3 + $0x214] sm:$0xff]
    %v242 = vld [vmem:[%s3 + $0x21c] sm:$0xff]
    %v243 = vld [vmem:[%s3 + $0x224] sm:$0xff]
    %v244 = vld [vmem:[%s3 + $0x22c] sm:$0xf]
    %v245 = vld [vmem:[%s3 + $0x230] sm:$0xff]
    %v246 = vld [vmem:[%s3 + $0x238] sm:$0xff]
    %v247 = vld [vmem:[%s3 + $0x240] sm:$0xff]
    %v248 = vld [vmem:[%s3 + $0x248] sm:$0xf]
    %v249 = vld [vmem:[%s3 + $0x24c] sm:$0xff]
    %v250 = vld [vmem:[%s3 + $0x254] sm:$0xff]
    %v251 = vld [vmem:[%s3 + $0x25c] sm:$0xff]
    %v252 = vld [vmem:[%s3 + $0x264] sm:$0xf]
    %v253 = vld [vmem:[%s3 + $0x268] sm:$0xff]
    %v254 = vld [vmem:[%s3 + $0x270] sm:$0xff]
    %v255 = vld [vmem:[%s3 + $0x278] sm:$0xff]
    %v256 = vld [vmem:[%s3 + $0x280] sm:$0xf]
    %v257 = vld [vmem:[%s3 + $0x284] sm:$0xff]
    %v258 = vld [vmem:[%s3 + $0x28c] sm:$0xff]
    %v259 = vld [vmem:[%s3 + $0x294] sm:$0xff]
    %v260 = vld [vmem:[%s3 + $0x29c] sm:$0xf]
    %v261 = vld [vmem:[%s3 + $0x2a0] sm:$0xff]
    %v262 = vld [vmem:[%s3 + $0x2a8] sm:$0xff]
    %v263 = vld [vmem:[%s3 + $0x2b0] sm:$0xff]
    %v264 = vld [vmem:[%s3 + $0x2b8] sm:$0xf]
    %v265 = vld [vmem:[%s3 + $0x2bc] sm:$0xff]
    %v266 = vld [vmem:[%s3 + $0x2c4] sm:$0xff]
    %v267 = vld [vmem:[%s3 + $0x2cc] sm:$0xff]
    %v268 = vld [vmem:[%s3 + $0x2d4] sm:$0xf]
    %v269 = vld [vmem:[%s3 + $0x2d8] sm:$0xff]
    %v270 = vld [vmem:[%s3 + $0x2e0] sm:$0xff]
    %v271 = vld [vmem:[%s3 + $0x2e8] sm:$0xff]
    %v272 = vld [vmem:[%s3 + $0x2f0] sm:$0xf]
    %v273 = vld [vmem:[%s3 + $0x2f4] sm:$0xff]
    %v274 = vld [vmem:[%s3 + $0x2fc] sm:$0xff]
    %v275 = vld [vmem:[%s3 + $0x304] sm:$0xff]
    %v276 = vld [vmem:[%s3 + $0x30c] sm:$0xf]
    %v277 = vld [vmem:[%s3 + $0x310] sm:$0xff]
    %v278 = vld [vmem:[%s3 + $0x318] sm:$0xff]
    %v279 = vld [vmem:[%s3 + $0x320] sm:$0xff]
    %v280 = vld [vmem:[%s3 + $0x328] sm:$0xf]
    %v281 = vld [vmem:[%s3 + $0x32c] sm:$0xff]
    %v282 = vld [vmem:[%s3 + $0x334] sm:$0xff]
    %v283 = vld [vmem:[%s3 + $0x33c] sm:$0xff]
    %v284 = vld [vmem:[%s3 + $0x344] sm:$0xf]
    %v285 = vld [vmem:[%s3 + $0x348] sm:$0xff]
    %v286 = vld [vmem:[%s3 + $0x350] sm:$0xff]
    %v287 = vld [vmem:[%s3 + $0x358] sm:$0xff]
    %v288 = vld [vmem:[%s3 + $0x360] sm:$0xf]
    %v289 = vld [vmem:[%s3 + $0x364] sm:$0xff]
    %v290 = vld [vmem:[%s3 + $0x36c] sm:$0xff]
    %v291 = vld [vmem:[%s3 + $0x374] sm:$0xff]
    %v292 = vld [vmem:[%s3 + $0x37c] sm:$0xf]
    %v293 = vld [vmem:[%s3 + $0x380] sm:$0xff]
    %v294 = vld [vmem:[%s3 + $0x388] sm:$0xff]
    %v295 = vld [vmem:[%s3 + $0x390] sm:$0xff]
    %v296 = vld [vmem:[%s3 + $0x398] sm:$0xf]
    %v297 = vld [vmem:[%s3 + $0x39c] sm:$0xff]
    %v298 = vld [vmem:[%s3 + $0x3a4] sm:$0xff]
    %v299 = vld [vmem:[%s3 + $0x3ac] sm:$0xff]
    %v300 = vld [vmem:[%s3 + $0x3b4] sm:$0xf]
    %v301 = vld [vmem:[%s3 + $0x3b8] sm:$0xff]
    %v302 = vld [vmem:[%s3 + $0x3c0] sm:$0xff]
    %v303 = vld [vmem:[%s3 + $0x3c8] sm:$0xff]
    %v304 = vld [vmem:[%s3 + $0x3d0] sm:$0xf]
    %v305 = vld [vmem:[%s3 + $0x3d4] sm:$0xff]
    %v306 = vld [vmem:[%s3 + $0x3dc] sm:$0xff]
    %v307 = vld [vmem:[%s3 + $0x3e4] sm:$0xff]
    %v308 = vld [vmem:[%s3 + $0x3ec] sm:$0xf]
    %v309 = vld [vmem:[%s3 + $0x3f0] sm:$0xff]
    %v310 = vld [vmem:[%s3 + $0x3f8] sm:$0xff]
    %v311 = vld [vmem:[%s3 + $0x400] sm:$0xff]
    %v312 = vld [vmem:[%s3 + $0x408] sm:$0xf]
    %v313 = vld [vmem:[%s3 + $0x40c] sm:$0xff]
    %v314 = vld [vmem:[%s3 + $0x414] sm:$0xff]
    %v315 = vld [vmem:[%s3 + $0x41c] sm:$0xff]
    %v316 = vld [vmem:[%s3 + $0x424] sm:$0xf]
    %v317 = vld [vmem:[%s3 + $0x428] sm:$0xff]
    %v318 = vld [vmem:[%s3 + $0x430] sm:$0xff]
    %v319 = vld [vmem:[%s3 + $0x438] sm:$0xff]
    %v320 = vld [vmem:[%s3 + $0x440] sm:$0xf]
    %v321 = vld [vmem:[%s3 + $0x444] sm:$0xff]
    %v322 = vld [vmem:[%s3 + $0x44c] sm:$0xff]
    %v323 = vld [vmem:[%s3 + $0x454] sm:$0xff]
    %v324 = vld [vmem:[%s3 + $0x45c] sm:$0xf]
    %v325 = vld [vmem:[%s3 + $0x460] sm:$0xff]
    %v326 = vld [vmem:[%s3 + $0x468] sm:$0xff]
    %v327 = vld [vmem:[%s3 + $0x470] sm:$0xff]
    %v328 = vld [vmem:[%s3 + $0x478] sm:$0xf]
    %v329 = vld [vmem:[%s3 + $0x47c] sm:$0xff]
    %v330 = vld [vmem:[%s3 + $0x484] sm:$0xff]
    %v331 = vld [vmem:[%s3 + $0x48c] sm:$0xff]
    %v332 = vld [vmem:[%s3 + $0x494] sm:$0xf]
    %v333 = vld [vmem:[%s3 + $0x498] sm:$0xff]
    %v334 = vld [vmem:[%s3 + $0x4a0] sm:$0xff]
    %v335 = vld [vmem:[%s3 + $0x4a8] sm:$0xff]
    %v336 = vld [vmem:[%s3 + $0x4b0] sm:$0xf]
    %v337 = vld [vmem:[%s3 + $0x4b4] sm:$0xff]
    %v338 = vld [vmem:[%s3 + $0x4bc] sm:$0xff]
    %v339 = vld [vmem:[%s3 + $0x4c4] sm:$0xff]
    %v340 = vld [vmem:[%s3 + $0x4cc] sm:$0xf]
    %v341 = vld [vmem:[%s3 + $0x4d0] sm:$0xff]
    %v342 = vld [vmem:[%s3 + $0x4d8] sm:$0xff]
    %v343 = vld [vmem:[%s3 + $0x4e0] sm:$0xff]
    %v344 = vld [vmem:[%s3 + $0x4e8] sm:$0xf]
    %v345 = vld [vmem:[%s3 + $0x4ec] sm:$0xff]
    %v346 = vld [vmem:[%s3 + $0x4f4] sm:$0xff]
    %v347 = vld [vmem:[%s3 + $0x4fc] sm:$0xff]
    %v348 = vld [vmem:[%s3 + $0x504] sm:$0xf]
    %v349 = vld [vmem:[%s3 + $0x508] sm:$0xff]
    %v350 = vld [vmem:[%s3 + $0x510] sm:$0xff]
    %v351 = vld [vmem:[%s3 + $0x518] sm:$0xff]
    %v352 = vld [vmem:[%s3 + $0x520] sm:$0xf]
    %v353 = vld [vmem:[%s3 + $0x524] sm:$0xff]
    %v354 = vld [vmem:[%s3 + $0x52c] sm:$0xff]
    %v355 = vld [vmem:[%s3 + $0x534] sm:$0xff]
    %v356 = vld [vmem:[%s3 + $0x53c] sm:$0xf]
    %v357 = vld [vmem:[%s3 + $0x540] sm:$0xff]
    %v358 = vld [vmem:[%s3 + $0x548] sm:$0xff]
    %v359 = vld [vmem:[%s3 + $0x550] sm:$0xff]
    %v360 = vld [vmem:[%s3 + $0x558] sm:$0xf]
    %v361 = vld [vmem:[%s3 + $0x55c] sm:$0xff]
    %v362 = vld [vmem:[%s3 + $0x564] sm:$0xff]
    %v363 = vld [vmem:[%s3 + $0x56c] sm:$0xff]
    %v364 = vld [vmem:[%s3 + $0x574] sm:$0xf]
    %v365 = vld [vmem:[%s3 + $0x578] sm:$0xff]
    %v366 = vld [vmem:[%s3 + $0x580] sm:$0xff]
    %v367 = vld [vmem:[%s3 + $0x588] sm:$0xff]
    %v368 = vld [vmem:[%s3 + $0x590] sm:$0xf]
    %v369 = vld [vmem:[%s3 + $0x594] sm:$0xff]
    %v370 = vld [vmem:[%s3 + $0x59c] sm:$0xff]
    %v371 = vld [vmem:[%s3 + $0x5a4] sm:$0xff]
    %v372 = vld [vmem:[%s3 + $0x5ac] sm:$0xf]
    %v373 = vld [vmem:[%s3 + $0x5b0] sm:$0xff]
    %v374 = vld [vmem:[%s3 + $0x5b8] sm:$0xff]
    %v375 = vld [vmem:[%s3 + $0x5c0] sm:$0xff]
    %v376 = vld [vmem:[%s3 + $0x5c8] sm:$0xf]
    %v377 = vld [vmem:[%s3 + $0x5cc] sm:$0xff]
    %v378 = vld [vmem:[%s3 + $0x5d4] sm:$0xff]
    %v379 = vld [vmem:[%s3 + $0x5dc] sm:$0xff]
    %v380 = vld [vmem:[%s3 + $0x5e4] sm:$0xf]
    %v381 = vld [vmem:[%s3 + $0x5e8] sm:$0xff]
    %v382 = vld [vmem:[%s3 + $0x5f0] sm:$0xff]
    %v383 = vld [vmem:[%s3 + $0x5f8] sm:$0xff]
    %v384 = vld [vmem:[%s3 + $0x600] sm:$0xf]
    %v385 = vld [vmem:[%s3 + $0x604] sm:$0xff]
    %v386 = vld [vmem:[%s3 + $0x60c] sm:$0xff]
    %v387 = vld [vmem:[%s3 + $0x614] sm:$0xff]
    %v388 = vld [vmem:[%s3 + $0x61c] sm:$0xf]
    %v389 = vld [vmem:[%s3 + $0x620] sm:$0xff]
    %v390 = vld [vmem:[%s3 + $0x628] sm:$0xff]
    %v391 = vld [vmem:[%s3 + $0x630] sm:$0xff]
    %v392 = vld [vmem:[%s3 + $0x638] sm:$0xf]
    %v393 = vld [vmem:[%s3 + $0x63c] sm:$0xff]
    %v394 = vld [vmem:[%s3 + $0x644] sm:$0xff]
    %v395 = vld [vmem:[%s3 + $0x64c] sm:$0xff]
    %v396 = vld [vmem:[%s3 + $0x654] sm:$0xf]
    %v397 = vld [vmem:[%s3 + $0x658] sm:$0xff]
    %v398 = vld [vmem:[%s3 + $0x660] sm:$0xff]
    %v399 = vld [vmem:[%s3 + $0x668] sm:$0xff]
    %v400 = vld [vmem:[%s3 + $0x670] sm:$0xf]
    %v401 = vld [vmem:[%s3 + $0x674] sm:$0xff]
    %v402 = vld [vmem:[%s3 + $0x67c] sm:$0xff]
    %v403 = vld [vmem:[%s3 + $0x684] sm:$0xff]
    %v404 = vld [vmem:[%s3 + $0x68c] sm:$0xf]
    %v405 = vld [vmem:[%s3 + $0x690] sm:$0xff]
    %v406 = vld [vmem:[%s3 + $0x698] sm:$0xff]
    %v407 = vld [vmem:[%s3 + $0x6a0] sm:$0xff]
    %v408 = vld [vmem:[%s3 + $0x6a8] sm:$0xf]
    %v409 = vld [vmem:[%s3 + $0x6ac] sm:$0xff]
    %v410 = vld [vmem:[%s3 + $0x6b4] sm:$0xff]
    %v411 = vld [vmem:[%s3 + $0x6bc] sm:$0xff]
    %v412 = vld [vmem:[%s3 + $0x6c4] sm:$0xf]
    %v413 = vld [vmem:[%s3 + $0x6c8] sm:$0xff]
    %v414 = vld [vmem:[%s3 + $0x6d0] sm:$0xff]
    %v415 = vld [vmem:[%s3 + $0x6d8] sm:$0xff]
    %v416 = vld [vmem:[%s3 + $0x6e0] sm:$0xf]
    %v417 = vld [vmem:[%s3 + $0x6e4] sm:$0xff]
    %v418 = vld [vmem:[%s3 + $0x6ec] sm:$0xff]
    %v419 = vld [vmem:[%s3 + $0x6f4] sm:$0xff]
    %v420 = vld [vmem:[%s3 + $0x6fc] sm:$0xf]
    %v421 = vld [vmem:[%s4] sm:$0x7f]
    %v423 = vlaneseq
    %v424 = vshrl.u32 %v423, 7
    %v425 = vsub.s32 0, %v424
    %v426 = vrot.slane %v421, %v425
    %v427 = vlaneseq
    %v428 = vshrl.u32 %v427, 7
    %v429 = vsub.s32 1, %v428
    %v430 = vrot.slane %v421, %v429
    %v431 = vlaneseq
    %v432 = vshrl.u32 %v431, 7
    %v433 = vsub.s32 2, %v432
    %v434 = vrot.slane %v421, %v433
    %v435 = vlaneseq
    %v436 = vshrl.u32 %v435, 7
    %v437 = vsub.s32 3, %v436
    %v438 = vrot.slane %v421, %v437
    %v439 = vlaneseq
    %v440 = vshrl.u32 %v439, 7
    %v441 = vsub.s32 4, %v440
    %v442 = vrot.slane %v421, %v441
    %v443 = vlaneseq
    %v444 = vshrl.u32 %v443, 7
    %v445 = vsub.s32 5, %v444
    %v446 = vrot.slane %v421, %v445
    %v447 = vlaneseq
    %v448 = vshrl.u32 %v447, 7
    %v449 = vsub.s32 6, %v448
    %v450 = vrot.slane %v421, %v449
    %v714 = vunpack.c.l.b16 %v165
    %v715 = vunpack.c.h.b16 %v165
    %v716 = vunpack.c.l.b16 %v166
    %v717 = vunpack.c.h.b16 %v166
    %v718 = vunpack.c.l.b16 %v167
    %v719 = vunpack.c.h.b16 %v167
    %v720 = vunpack.c.l.b16 %v168
    %v721 = vunpack.c.l.b16 %v169
    %v722 = vunpack.c.h.b16 %v169
    %v723 = vunpack.c.l.b16 %v170
    %v724 = vunpack.c.h.b16 %v170
    %v725 = vunpack.c.l.b16 %v171
    %v726 = vunpack.c.h.b16 %v171
    %v727 = vunpack.c.l.b16 %v172
    %v728 = vunpack.c.l.b16 %v173
    %v729 = vunpack.c.h.b16 %v173
    %v730 = vunpack.c.l.b16 %v174
    %v731 = vunpack.c.h.b16 %v174
    %v732 = vunpack.c.l.b16 %v175
    %v733 = vunpack.c.h.b16 %v175
    %v734 = vunpack.c.l.b16 %v176
    %v735 = vunpack.c.l.b16 %v177
    %v736 = vunpack.c.h.b16 %v177
    %v737 = vunpack.c.l.b16 %v178
    %v738 = vunpack.c.h.b16 %v178
    %v739 = vunpack.c.l.b16 %v179
    %v740 = vunpack.c.h.b16 %v179
    %v741 = vunpack.c.l.b16 %v180
    %v742 = vunpack.c.l.b16 %v181
    %v743 = vunpack.c.h.b16 %v181
    %v744 = vunpack.c.l.b16 %v182
    %v745 = vunpack.c.h.b16 %v182
    %v746 = vunpack.c.l.b16 %v183
    %v747 = vunpack.c.h.b16 %v183
    %v748 = vunpack.c.l.b16 %v184
    %v749 = vunpack.c.l.b16 %v185
    %v750 = vunpack.c.h.b16 %v185
    %v751 = vunpack.c.l.b16 %v186
    %v752 = vunpack.c.h.b16 %v186
    %v753 = vunpack.c.l.b16 %v187
    %v754 = vunpack.c.h.b16 %v187
    %v755 = vunpack.c.l.b16 %v188
    %v756 = vunpack.c.l.b16 %v189
    %v757 = vunpack.c.h.b16 %v189
    %v758 = vunpack.c.l.b16 %v190
    %v759 = vunpack.c.h.b16 %v190
    %v760 = vunpack.c.l.b16 %v191
    %v761 = vunpack.c.h.b16 %v191
    %v762 = vunpack.c.l.b16 %v192
    %v763 = vunpack.c.l.b16 %v193
    %v764 = vunpack.c.h.b16 %v193
    %v765 = vunpack.c.l.b16 %v194
    %v766 = vunpack.c.h.b16 %v194
    %v767 = vunpack.c.l.b16 %v195
    %v768 = vunpack.c.h.b16 %v195
    %v769 = vunpack.c.l.b16 %v196
    %v770 = vunpack.c.l.b16 %v197
    %v771 = vunpack.c.h.b16 %v197
    %v772 = vunpack.c.l.b16 %v198
    %v773 = vunpack.c.h.b16 %v198
    %v774 = vunpack.c.l.b16 %v199
    %v775 = vunpack.c.h.b16 %v199
    %v776 = vunpack.c.l.b16 %v200
    %v777 = vunpack.c.l.b16 %v201
    %v778 = vunpack.c.h.b16 %v201
    %v779 = vunpack.c.l.b16 %v202
    %v780 = vunpack.c.h.b16 %v202
    %v781 = vunpack.c.l.b16 %v203
    %v782 = vunpack.c.h.b16 %v203
    %v783 = vunpack.c.l.b16 %v204
    %v784 = vunpack.c.l.b16 %v205
    %v785 = vunpack.c.h.b16 %v205
    %v786 = vunpack.c.l.b16 %v206
    %v787 = vunpack.c.h.b16 %v206
    %v788 = vunpack.c.l.b16 %v207
    %v789 = vunpack.c.h.b16 %v207
    %v790 = vunpack.c.l.b16 %v208
    %v791 = vunpack.c.l.b16 %v209
    %v792 = vunpack.c.h.b16 %v209
    %v793 = vunpack.c.l.b16 %v210
    %v794 = vunpack.c.h.b16 %v210
    %v795 = vunpack.c.l.b16 %v211
    %v796 = vunpack.c.h.b16 %v211
    %v797 = vunpack.c.l.b16 %v212
    %v798 = vunpack.c.l.b16 %v213
    %v799 = vunpack.c.h.b16 %v213
    %v800 = vunpack.c.l.b16 %v214
    %v801 = vunpack.c.h.b16 %v214
    %v802 = vunpack.c.l.b16 %v215
    %v803 = vunpack.c.h.b16 %v215
    %v804 = vunpack.c.l.b16 %v216
    %v805 = vunpack.c.l.b16 %v217
    %v806 = vunpack.c.h.b16 %v217
    %v807 = vunpack.c.l.b16 %v218
    %v808 = vunpack.c.h.b16 %v218
    %v809 = vunpack.c.l.b16 %v219
    %v810 = vunpack.c.h.b16 %v219
    %v811 = vunpack.c.l.b16 %v220
    %v812 = vunpack.c.l.b16 %v221
    %v813 = vunpack.c.h.b16 %v221
    %v814 = vunpack.c.l.b16 %v222
    %v815 = vunpack.c.h.b16 %v222
    %v816 = vunpack.c.l.b16 %v223
    %v817 = vunpack.c.h.b16 %v223
    %v818 = vunpack.c.l.b16 %v224
    %v819 = vunpack.c.l.b16 %v225
    %v820 = vunpack.c.h.b16 %v225
    %v821 = vunpack.c.l.b16 %v226
    %v822 = vunpack.c.h.b16 %v226
    %v823 = vunpack.c.l.b16 %v227
    %v824 = vunpack.c.h.b16 %v227
    %v825 = vunpack.c.l.b16 %v228
    %v826 = vunpack.c.l.b16 %v229
    %v827 = vunpack.c.h.b16 %v229
    %v828 = vunpack.c.l.b16 %v230
    %v829 = vunpack.c.h.b16 %v230
    %v830 = vunpack.c.l.b16 %v231
    %v831 = vunpack.c.h.b16 %v231
    %v832 = vunpack.c.l.b16 %v232
    %v833 = vunpack.c.l.b16 %v233
    %v834 = vunpack.c.h.b16 %v233
    %v835 = vunpack.c.l.b16 %v234
    %v836 = vunpack.c.h.b16 %v234
    %v837 = vunpack.c.l.b16 %v235
    %v838 = vunpack.c.h.b16 %v235
    %v839 = vunpack.c.l.b16 %v236
    %v840 = vunpack.c.l.b16 %v237
    %v841 = vunpack.c.h.b16 %v237
    %v842 = vunpack.c.l.b16 %v238
    %v843 = vunpack.c.h.b16 %v238
    %v844 = vunpack.c.l.b16 %v239
    %v845 = vunpack.c.h.b16 %v239
    %v846 = vunpack.c.l.b16 %v240
    %v847 = vunpack.c.l.b16 %v241
    %v848 = vunpack.c.h.b16 %v241
    %v849 = vunpack.c.l.b16 %v242
    %v850 = vunpack.c.h.b16 %v242
    %v851 = vunpack.c.l.b16 %v243
    %v852 = vunpack.c.h.b16 %v243
    %v853 = vunpack.c.l.b16 %v244
    %v854 = vunpack.c.l.b16 %v245
    %v855 = vunpack.c.h.b16 %v245
    %v856 = vunpack.c.l.b16 %v246
    %v857 = vunpack.c.h.b16 %v246
    %v858 = vunpack.c.l.b16 %v247
    %v859 = vunpack.c.h.b16 %v247
    %v860 = vunpack.c.l.b16 %v248
    %v861 = vunpack.c.l.b16 %v249
    %v862 = vunpack.c.h.b16 %v249
    %v863 = vunpack.c.l.b16 %v250
    %v864 = vunpack.c.h.b16 %v250
    %v865 = vunpack.c.l.b16 %v251
    %v866 = vunpack.c.h.b16 %v251
    %v867 = vunpack.c.l.b16 %v252
    %v868 = vunpack.c.l.b16 %v253
    %v869 = vunpack.c.h.b16 %v253
    %v870 = vunpack.c.l.b16 %v254
    %v871 = vunpack.c.h.b16 %v254
    %v872 = vunpack.c.l.b16 %v255
    %v873 = vunpack.c.h.b16 %v255
    %v874 = vunpack.c.l.b16 %v256
    %v875 = vunpack.c.l.b16 %v257
    %v876 = vunpack.c.h.b16 %v257
    %v877 = vunpack.c.l.b16 %v258
    %v878 = vunpack.c.h.b16 %v258
    %v879 = vunpack.c.l.b16 %v259
    %v880 = vunpack.c.h.b16 %v259
    %v881 = vunpack.c.l.b16 %v260
    %v882 = vunpack.c.l.b16 %v261
    %v883 = vunpack.c.h.b16 %v261
    %v884 = vunpack.c.l.b16 %v262
    %v885 = vunpack.c.h.b16 %v262
    %v886 = vunpack.c.l.b16 %v263
    %v887 = vunpack.c.h.b16 %v263
    %v888 = vunpack.c.l.b16 %v264
    %v889 = vunpack.c.l.b16 %v265
    %v890 = vunpack.c.h.b16 %v265
    %v891 = vunpack.c.l.b16 %v266
    %v892 = vunpack.c.h.b16 %v266
    %v893 = vunpack.c.l.b16 %v267
    %v894 = vunpack.c.h.b16 %v267
    %v895 = vunpack.c.l.b16 %v268
    %v896 = vunpack.c.l.b16 %v269
    %v897 = vunpack.c.h.b16 %v269
    %v898 = vunpack.c.l.b16 %v270
    %v899 = vunpack.c.h.b16 %v270
    %v900 = vunpack.c.l.b16 %v271
    %v901 = vunpack.c.h.b16 %v271
    %v902 = vunpack.c.l.b16 %v272
    %v903 = vunpack.c.l.b16 %v273
    %v904 = vunpack.c.h.b16 %v273
    %v905 = vunpack.c.l.b16 %v274
    %v906 = vunpack.c.h.b16 %v274
    %v907 = vunpack.c.l.b16 %v275
    %v908 = vunpack.c.h.b16 %v275
    %v909 = vunpack.c.l.b16 %v276
    %v910 = vunpack.c.l.b16 %v277
    %v911 = vunpack.c.h.b16 %v277
    %v912 = vunpack.c.l.b16 %v278
    %v913 = vunpack.c.h.b16 %v278
    %v914 = vunpack.c.l.b16 %v279
    %v915 = vunpack.c.h.b16 %v279
    %v916 = vunpack.c.l.b16 %v280
    %v917 = vunpack.c.l.b16 %v281
    %v918 = vunpack.c.h.b16 %v281
    %v919 = vunpack.c.l.b16 %v282
    %v920 = vunpack.c.h.b16 %v282
    %v921 = vunpack.c.l.b16 %v283
    %v922 = vunpack.c.h.b16 %v283
    %v923 = vunpack.c.l.b16 %v284
    %v924 = vunpack.c.l.b16 %v285
    %v925 = vunpack.c.h.b16 %v285
    %v926 = vunpack.c.l.b16 %v286
    %v927 = vunpack.c.h.b16 %v286
    %v928 = vunpack.c.l.b16 %v287
    %v929 = vunpack.c.h.b16 %v287
    %v930 = vunpack.c.l.b16 %v288
    %v931 = vunpack.c.l.b16 %v289
    %v932 = vunpack.c.h.b16 %v289
    %v933 = vunpack.c.l.b16 %v290
    %v934 = vunpack.c.h.b16 %v290
    %v935 = vunpack.c.l.b16 %v291
    %v936 = vunpack.c.h.b16 %v291
    %v937 = vunpack.c.l.b16 %v292
    %v938 = vunpack.c.l.b16 %v293
    %v939 = vunpack.c.h.b16 %v293
    %v940 = vunpack.c.l.b16 %v294
    %v941 = vunpack.c.h.b16 %v294
    %v942 = vunpack.c.l.b16 %v295
    %v943 = vunpack.c.h.b16 %v295
    %v944 = vunpack.c.l.b16 %v296
    %v945 = vunpack.c.l.b16 %v297
    %v946 = vunpack.c.h.b16 %v297
    %v947 = vunpack.c.l.b16 %v298
    %v948 = vunpack.c.h.b16 %v298
    %v949 = vunpack.c.l.b16 %v299
    %v950 = vunpack.c.h.b16 %v299
    %v951 = vunpack.c.l.b16 %v300
    %v952 = vunpack.c.l.b16 %v301
    %v953 = vunpack.c.h.b16 %v301
    %v954 = vunpack.c.l.b16 %v302
    %v955 = vunpack.c.h.b16 %v302
    %v956 = vunpack.c.l.b16 %v303
    %v957 = vunpack.c.h.b16 %v303
    %v958 = vunpack.c.l.b16 %v304
    %v959 = vunpack.c.l.b16 %v305
    %v960 = vunpack.c.h.b16 %v305
    %v961 = vunpack.c.l.b16 %v306
    %v962 = vunpack.c.h.b16 %v306
    %v963 = vunpack.c.l.b16 %v307
    %v964 = vunpack.c.h.b16 %v307
    %v965 = vunpack.c.l.b16 %v308
    %v966 = vunpack.c.l.b16 %v309
    %v967 = vunpack.c.h.b16 %v309
    %v968 = vunpack.c.l.b16 %v310
    %v969 = vunpack.c.h.b16 %v310
    %v970 = vunpack.c.l.b16 %v311
    %v971 = vunpack.c.h.b16 %v311
    %v972 = vunpack.c.l.b16 %v312
    %v973 = vunpack.c.l.b16 %v313
    %v974 = vunpack.c.h.b16 %v313
    %v975 = vunpack.c.l.b16 %v314
    %v976 = vunpack.c.h.b16 %v314
    %v977 = vunpack.c.l.b16 %v315
    %v978 = vunpack.c.h.b16 %v315
    %v979 = vunpack.c.l.b16 %v316
    %v980 = vunpack.c.l.b16 %v317
    %v981 = vunpack.c.h.b16 %v317
    %v982 = vunpack.c.l.b16 %v318
    %v983 = vunpack.c.h.b16 %v318
    %v984 = vunpack.c.l.b16 %v319
    %v985 = vunpack.c.h.b16 %v319
    %v986 = vunpack.c.l.b16 %v320
    %v987 = vunpack.c.l.b16 %v321
    %v988 = vunpack.c.h.b16 %v321
    %v989 = vunpack.c.l.b16 %v322
    %v990 = vunpack.c.h.b16 %v322
    %v991 = vunpack.c.l.b16 %v323
    %v992 = vunpack.c.h.b16 %v323
    %v993 = vunpack.c.l.b16 %v324
    %v994 = vunpack.c.l.b16 %v325
    %v995 = vunpack.c.h.b16 %v325
    %v996 = vunpack.c.l.b16 %v326
    %v997 = vunpack.c.h.b16 %v326
    %v998 = vunpack.c.l.b16 %v327
    %v999 = vunpack.c.h.b16 %v327
    %v1000 = vunpack.c.l.b16 %v328
    %v1001 = vunpack.c.l.b16 %v329
    %v1002 = vunpack.c.h.b16 %v329
    %v1003 = vunpack.c.l.b16 %v330
    %v1004 = vunpack.c.h.b16 %v330
    %v1005 = vunpack.c.l.b16 %v331
    %v1006 = vunpack.c.h.b16 %v331
    %v1007 = vunpack.c.l.b16 %v332
    %v1008 = vunpack.c.l.b16 %v333
    %v1009 = vunpack.c.h.b16 %v333
    %v1010 = vunpack.c.l.b16 %v334
    %v1011 = vunpack.c.h.b16 %v334
    %v1012 = vunpack.c.l.b16 %v335
    %v1013 = vunpack.c.h.b16 %v335
    %v1014 = vunpack.c.l.b16 %v336
    %v1015 = vunpack.c.l.b16 %v337
    %v1016 = vunpack.c.h.b16 %v337
    %v1017 = vunpack.c.l.b16 %v338
    %v1018 = vunpack.c.h.b16 %v338
    %v1019 = vunpack.c.l.b16 %v339
    %v1020 = vunpack.c.h.b16 %v339
    %v1021 = vunpack.c.l.b16 %v340
    %v1022 = vunpack.c.l.b16 %v341
    %v1023 = vunpack.c.h.b16 %v341
    %v1024 = vunpack.c.l.b16 %v342
    %v1025 = vunpack.c.h.b16 %v342
    %v1026 = vunpack.c.l.b16 %v343
    %v1027 = vunpack.c.h.b16 %v343
    %v1028 = vunpack.c.l.b16 %v344
    %v1029 = vunpack.c.l.b16 %v345
    %v1030 = vunpack.c.h.b16 %v345
    %v1031 = vunpack.c.l.b16 %v346
    %v1032 = vunpack.c.h.b16 %v346
    %v1033 = vunpack.c.l.b16 %v347
    %v1034 = vunpack.c.h.b16 %v347
    %v1035 = vunpack.c.l.b16 %v348
    %v1036 = vunpack.c.l.b16 %v349
    %v1037 = vunpack.c.h.b16 %v349
    %v1038 = vunpack.c.l.b16 %v350
    %v1039 = vunpack.c.h.b16 %v350
    %v1040 = vunpack.c.l.b16 %v351
    %v1041 = vunpack.c.h.b16 %v351
    %v1042 = vunpack.c.l.b16 %v352
    %v1043 = vunpack.c.l.b16 %v353
    %v1044 = vunpack.c.h.b16 %v353
    %v1045 = vunpack.c.l.b16 %v354
    %v1046 = vunpack.c.h.b16 %v354
    %v1047 = vunpack.c.l.b16 %v355
    %v1048 = vunpack.c.h.b16 %v355
    %v1049 = vunpack.c.l.b16 %v356
    %v1050 = vunpack.c.l.b16 %v357
    %v1051 = vunpack.c.h.b16 %v357
    %v1052 = vunpack.c.l.b16 %v358
    %v1053 = vunpack.c.h.b16 %v358
    %v1054 = vunpack.c.l.b16 %v359
    %v1055 = vunpack.c.h.b16 %v359
    %v1056 = vunpack.c.l.b16 %v360
    %v1057 = vunpack.c.l.b16 %v361
    %v1058 = vunpack.c.h.b16 %v361
    %v1059 = vunpack.c.l.b16 %v362
    %v1060 = vunpack.c.h.b16 %v362
    %v1061 = vunpack.c.l.b16 %v363
    %v1062 = vunpack.c.h.b16 %v363
    %v1063 = vunpack.c.l.b16 %v364
    %v1064 = vunpack.c.l.b16 %v365
    %v1065 = vunpack.c.h.b16 %v365
    %v1066 = vunpack.c.l.b16 %v366
    %v1067 = vunpack.c.h.b16 %v366
    %v1068 = vunpack.c.l.b16 %v367
    %v1069 = vunpack.c.h.b16 %v367
    %v1070 = vunpack.c.l.b16 %v368
    %v1071 = vunpack.c.l.b16 %v369
    %v1072 = vunpack.c.h.b16 %v369
    %v1073 = vunpack.c.l.b16 %v370
    %v1074 = vunpack.c.h.b16 %v370
    %v1075 = vunpack.c.l.b16 %v371
    %v1076 = vunpack.c.h.b16 %v371
    %v1077 = vunpack.c.l.b16 %v372
    %v1078 = vunpack.c.l.b16 %v373
    %v1079 = vunpack.c.h.b16 %v373
    %v1080 = vunpack.c.l.b16 %v374
    %v1081 = vunpack.c.h.b16 %v374
    %v1082 = vunpack.c.l.b16 %v375
    %v1083 = vunpack.c.h.b16 %v375
    %v1084 = vunpack.c.l.b16 %v376
    %v1085 = vunpack.c.l.b16 %v377
    %v1086 = vunpack.c.h.b16 %v377
    %v1087 = vunpack.c.l.b16 %v378
    %v1088 = vunpack.c.h.b16 %v378
    %v1089 = vunpack.c.l.b16 %v379
    %v1090 = vunpack.c.h.b16 %v379
    %v1091 = vunpack.c.l.b16 %v380
    %v1092 = vunpack.c.l.b16 %v381
    %v1093 = vunpack.c.h.b16 %v381
    %v1094 = vunpack.c.l.b16 %v382
    %v1095 = vunpack.c.h.b16 %v382
    %v1096 = vunpack.c.l.b16 %v383
    %v1097 = vunpack.c.h.b16 %v383
    %v1098 = vunpack.c.l.b16 %v384
    %v1099 = vunpack.c.l.b16 %v385
    %v1100 = vunpack.c.h.b16 %v385
    %v1101 = vunpack.c.l.b16 %v386
    %v1102 = vunpack.c.h.b16 %v386
    %v1103 = vunpack.c.l.b16 %v387
    %v1104 = vunpack.c.h.b16 %v387
    %v1105 = vunpack.c.l.b16 %v388
    %v1106 = vunpack.c.l.b16 %v389
    %v1107 = vunpack.c.h.b16 %v389
    %v1108 = vunpack.c.l.b16 %v390
    %v1109 = vunpack.c.h.b16 %v390
    %v1110 = vunpack.c.l.b16 %v391
    %v1111 = vunpack.c.h.b16 %v391
    %v1112 = vunpack.c.l.b16 %v392
    %v1113 = vunpack.c.l.b16 %v393
    %v1114 = vunpack.c.h.b16 %v393
    %v1115 = vunpack.c.l.b16 %v394
    %v1116 = vunpack.c.h.b16 %v394
    %v1117 = vunpack.c.l.b16 %v395
    %v1118 = vunpack.c.h.b16 %v395
    %v1119 = vunpack.c.l.b16 %v396
    %v1120 = vunpack.c.l.b16 %v397
    %v1121 = vunpack.c.h.b16 %v397
    %v1122 = vunpack.c.l.b16 %v398
    %v1123 = vunpack.c.h.b16 %v398
    %v1124 = vunpack.c.l.b16 %v399
    %v1125 = vunpack.c.h.b16 %v399
    %v1126 = vunpack.c.l.b16 %v400
    %v1127 = vunpack.c.l.b16 %v401
    %v1128 = vunpack.c.h.b16 %v401
    %v1129 = vunpack.c.l.b16 %v402
    %v1130 = vunpack.c.h.b16 %v402
    %v1131 = vunpack.c.l.b16 %v403
    %v1132 = vunpack.c.h.b16 %v403
    %v1133 = vunpack.c.l.b16 %v404
    %v1134 = vunpack.c.l.b16 %v405
    %v1135 = vunpack.c.h.b16 %v405
    %v1136 = vunpack.c.l.b16 %v406
    %v1137 = vunpack.c.h.b16 %v406
    %v1138 = vunpack.c.l.b16 %v407
    %v1139 = vunpack.c.h.b16 %v407
    %v1140 = vunpack.c.l.b16 %v408
    %v1141 = vunpack.c.l.b16 %v409
    %v1142 = vunpack.c.h.b16 %v409
    %v1143 = vunpack.c.l.b16 %v410
    %v1144 = vunpack.c.h.b16 %v410
    %v1145 = vunpack.c.l.b16 %v411
    %v1146 = vunpack.c.h.b16 %v411
    %v1147 = vunpack.c.l.b16 %v412
    %v1148 = vunpack.c.l.b16 %v413
    %v1149 = vunpack.c.h.b16 %v413
    %v1150 = vunpack.c.l.b16 %v414
    %v1151 = vunpack.c.h.b16 %v414
    %v1152 = vunpack.c.l.b16 %v415
    %v1153 = vunpack.c.h.b16 %v415
    %v1154 = vunpack.c.l.b16 %v416
    %v1155 = vunpack.c.l.b16 %v417
    %v1156 = vunpack.c.h.b16 %v417
    %v1157 = vunpack.c.l.b16 %v418
    %v1158 = vunpack.c.h.b16 %v418
    %v1159 = vunpack.c.l.b16 %v419
    %v1160 = vunpack.c.h.b16 %v419
    %v1161 = vunpack.c.l.b16 %v420
    %v1162 = vpack.c.b16 %v721, %v714
    %v1163 = vpack.c.b16 %v722, %v715
    %v1164 = vpack.c.b16 %v723, %v716
    %v1165 = vpack.c.b16 %v724, %v717
    %v1166 = vpack.c.b16 %v725, %v718
    %v1167 = vpack.c.b16 %v726, %v719
    %v1168 = vpack.c.b16 %v727, %v720
    %v1169 = vpack.c.b16 %v735, %v728
    %v1170 = vpack.c.b16 %v736, %v729
    %v1171 = vpack.c.b16 %v737, %v730
    %v1172 = vpack.c.b16 %v738, %v731
    %v1173 = vpack.c.b16 %v739, %v732
    %v1174 = vpack.c.b16 %v740, %v733
    %v1175 = vpack.c.b16 %v741, %v734
    %v1176 = vpack.c.b16 %v749, %v742
    %v1177 = vpack.c.b16 %v750, %v743
    %v1178 = vpack.c.b16 %v751, %v744
    %v1179 = vpack.c.b16 %v752, %v745
    %v1180 = vpack.c.b16 %v753, %v746
    %v1181 = vpack.c.b16 %v754, %v747
    %v1182 = vpack.c.b16 %v755, %v748
    %v1183 = vpack.c.b16 %v763, %v756
    %v1184 = vpack.c.b16 %v764, %v757
    %v1185 = vpack.c.b16 %v765, %v758
    %v1186 = vpack.c.b16 %v766, %v759
    %v1187 = vpack.c.b16 %v767, %v760
    %v1188 = vpack.c.b16 %v768, %v761
    %v1189 = vpack.c.b16 %v769, %v762
    %v1190 = vpack.c.b16 %v777, %v770
    %v1191 = vpack.c.b16 %v778, %v771
    %v1192 = vpack.c.b16 %v779, %v772
    %v1193 = vpack.c.b16 %v780, %v773
    %v1194 = vpack.c.b16 %v781, %v774
    %v1195 = vpack.c.b16 %v782, %v775
    %v1196 = vpack.c.b16 %v783, %v776
    %v1197 = vpack.c.b16 %v791, %v784
    %v1198 = vpack.c.b16 %v792, %v785
    %v1199 = vpack.c.b16 %v793, %v786
    %v1200 = vpack.c.b16 %v794, %v787
    %v1201 = vpack.c.b16 %v795, %v788
    %v1202 = vpack.c.b16 %v796, %v789
    %v1203 = vpack.c.b16 %v797, %v790
    %v1204 = vpack.c.b16 %v805, %v798
    %v1205 = vpack.c.b16 %v806, %v799
    %v1206 = vpack.c.b16 %v807, %v800
    %v1207 = vpack.c.b16 %v808, %v801
    %v1208 = vpack.c.b16 %v809, %v802
    %v1209 = vpack.c.b16 %v810, %v803
    %v1210 = vpack.c.b16 %v811, %v804
    %v1211 = vpack.c.b16 %v819, %v812
    %v1212 = vpack.c.b16 %v820, %v813
    %v1213 = vpack.c.b16 %v821, %v814
    %v1214 = vpack.c.b16 %v822, %v815
    %v1215 = vpack.c.b16 %v823, %v816
    %v1216 = vpack.c.b16 %v824, %v817
    %v1217 = vpack.c.b16 %v825, %v818
    %v1218 = vpack.c.b16 %v833, %v826
    %v1219 = vpack.c.b16 %v834, %v827
    %v1220 = vpack.c.b16 %v835, %v828
    %v1221 = vpack.c.b16 %v836, %v829
    %v1222 = vpack.c.b16 %v837, %v830
    %v1223 = vpack.c.b16 %v838, %v831
    %v1224 = vpack.c.b16 %v839, %v832
    %v1225 = vpack.c.b16 %v847, %v840
    %v1226 = vpack.c.b16 %v848, %v841
    %v1227 = vpack.c.b16 %v849, %v842
    %v1228 = vpack.c.b16 %v850, %v843
    %v1229 = vpack.c.b16 %v851, %v844
    %v1230 = vpack.c.b16 %v852, %v845
    %v1231 = vpack.c.b16 %v853, %v846
    %v1232 = vpack.c.b16 %v861, %v854
    %v1233 = vpack.c.b16 %v862, %v855
    %v1234 = vpack.c.b16 %v863, %v856
    %v1235 = vpack.c.b16 %v864, %v857
    %v1236 = vpack.c.b16 %v865, %v858
    %v1237 = vpack.c.b16 %v866, %v859
    %v1238 = vpack.c.b16 %v867, %v860
    %v1239 = vpack.c.b16 %v875, %v868
    %v1240 = vpack.c.b16 %v876, %v869
    %v1241 = vpack.c.b16 %v877, %v870
    %v1242 = vpack.c.b16 %v878, %v871
    %v1243 = vpack.c.b16 %v879, %v872
    %v1244 = vpack.c.b16 %v880, %v873
    %v1245 = vpack.c.b16 %v881, %v874
    %v1246 = vpack.c.b16 %v889, %v882
    %v1247 = vpack.c.b16 %v890, %v883
    %v1248 = vpack.c.b16 %v891, %v884
    %v1249 = vpack.c.b16 %v892, %v885
    %v1250 = vpack.c.b16 %v893, %v886
    %v1251 = vpack.c.b16 %v894, %v887
    %v1252 = vpack.c.b16 %v895, %v888
    %v1253 = vpack.c.b16 %v903, %v896
    %v1254 = vpack.c.b16 %v904, %v897
    %v1255 = vpack.c.b16 %v905, %v898
    %v1256 = vpack.c.b16 %v906, %v899
    %v1257 = vpack.c.b16 %v907, %v900
    %v1258 = vpack.c.b16 %v908, %v901
    %v1259 = vpack.c.b16 %v909, %v902
    %v1260 = vpack.c.b16 %v917, %v910
    %v1261 = vpack.c.b16 %v918, %v911
    %v1262 = vpack.c.b16 %v919, %v912
    %v1263 = vpack.c.b16 %v920, %v913
    %v1264 = vpack.c.b16 %v921, %v914
    %v1265 = vpack.c.b16 %v922, %v915
    %v1266 = vpack.c.b16 %v923, %v916
    %v1267 = vpack.c.b16 %v931, %v924
    %v1268 = vpack.c.b16 %v932, %v925
    %v1269 = vpack.c.b16 %v933, %v926
    %v1270 = vpack.c.b16 %v934, %v927
    %v1271 = vpack.c.b16 %v935, %v928
    %v1272 = vpack.c.b16 %v936, %v929
    %v1273 = vpack.c.b16 %v937, %v930
    %v1274 = vpack.c.b16 %v945, %v938
    %v1275 = vpack.c.b16 %v946, %v939
    %v1276 = vpack.c.b16 %v947, %v940
    %v1277 = vpack.c.b16 %v948, %v941
    %v1278 = vpack.c.b16 %v949, %v942
    %v1279 = vpack.c.b16 %v950, %v943
    %v1280 = vpack.c.b16 %v951, %v944
    %v1281 = vpack.c.b16 %v959, %v952
    %v1282 = vpack.c.b16 %v960, %v953
    %v1283 = vpack.c.b16 %v961, %v954
    %v1284 = vpack.c.b16 %v962, %v955
    %v1285 = vpack.c.b16 %v963, %v956
    %v1286 = vpack.c.b16 %v964, %v957
    %v1287 = vpack.c.b16 %v965, %v958
    %v1288 = vpack.c.b16 %v973, %v966
    %v1289 = vpack.c.b16 %v974, %v967
    %v1290 = vpack.c.b16 %v975, %v968
    %v1291 = vpack.c.b16 %v976, %v969
    %v1292 = vpack.c.b16 %v977, %v970
    %v1293 = vpack.c.b16 %v978, %v971
    %v1294 = vpack.c.b16 %v979, %v972
    %v1295 = vpack.c.b16 %v987, %v980
    %v1296 = vpack.c.b16 %v988, %v981
    %v1297 = vpack.c.b16 %v989, %v982
    %v1298 = vpack.c.b16 %v990, %v983
    %v1299 = vpack.c.b16 %v991, %v984
    %v1300 = vpack.c.b16 %v992, %v985
    %v1301 = vpack.c.b16 %v993, %v986
    %v1302 = vpack.c.b16 %v1001, %v994
    %v1303 = vpack.c.b16 %v1002, %v995
    %v1304 = vpack.c.b16 %v1003, %v996
    %v1305 = vpack.c.b16 %v1004, %v997
    %v1306 = vpack.c.b16 %v1005, %v998
    %v1307 = vpack.c.b16 %v1006, %v999
    %v1308 = vpack.c.b16 %v1007, %v1000
    %v1309 = vpack.c.b16 %v1015, %v1008
    %v1310 = vpack.c.b16 %v1016, %v1009
    %v1311 = vpack.c.b16 %v1017, %v1010
    %v1312 = vpack.c.b16 %v1018, %v1011
    %v1313 = vpack.c.b16 %v1019, %v1012
    %v1314 = vpack.c.b16 %v1020, %v1013
    %v1315 = vpack.c.b16 %v1021, %v1014
    %v1316 = vpack.c.b16 %v1029, %v1022
    %v1317 = vpack.c.b16 %v1030, %v1023
    %v1318 = vpack.c.b16 %v1031, %v1024
    %v1319 = vpack.c.b16 %v1032, %v1025
    %v1320 = vpack.c.b16 %v1033, %v1026
    %v1321 = vpack.c.b16 %v1034, %v1027
    %v1322 = vpack.c.b16 %v1035, %v1028
    %v1323 = vpack.c.b16 %v1043, %v1036
    %v1324 = vpack.c.b16 %v1044, %v1037
    %v1325 = vpack.c.b16 %v1045, %v1038
    %v1326 = vpack.c.b16 %v1046, %v1039
    %v1327 = vpack.c.b16 %v1047, %v1040
    %v1328 = vpack.c.b16 %v1048, %v1041
    %v1329 = vpack.c.b16 %v1049, %v1042
    %v1330 = vpack.c.b16 %v1057, %v1050
    %v1331 = vpack.c.b16 %v1058, %v1051
    %v1332 = vpack.c.b16 %v1059, %v1052
    %v1333 = vpack.c.b16 %v1060, %v1053
    %v1334 = vpack.c.b16 %v1061, %v1054
    %v1335 = vpack.c.b16 %v1062, %v1055
    %v1336 = vpack.c.b16 %v1063, %v1056
    %v1337 = vpack.c.b16 %v1071, %v1064
    %v1338 = vpack.c.b16 %v1072, %v1065
    %v1339 = vpack.c.b16 %v1073, %v1066
    %v1340 = vpack.c.b16 %v1074, %v1067
    %v1341 = vpack.c.b16 %v1075, %v1068
    %v1342 = vpack.c.b16 %v1076, %v1069
    %v1343 = vpack.c.b16 %v1077, %v1070
    %v1344 = vpack.c.b16 %v1085, %v1078
    %v1345 = vpack.c.b16 %v1086, %v1079
    %v1346 = vpack.c.b16 %v1087, %v1080
    %v1347 = vpack.c.b16 %v1088, %v1081
    %v1348 = vpack.c.b16 %v1089, %v1082
    %v1349 = vpack.c.b16 %v1090, %v1083
    %v1350 = vpack.c.b16 %v1091, %v1084
    %v1351 = vpack.c.b16 %v1099, %v1092
    %v1352 = vpack.c.b16 %v1100, %v1093
    %v1353 = vpack.c.b16 %v1101, %v1094
    %v1354 = vpack.c.b16 %v1102, %v1095
    %v1355 = vpack.c.b16 %v1103, %v1096
    %v1356 = vpack.c.b16 %v1104, %v1097
    %v1357 = vpack.c.b16 %v1105, %v1098
    %v1358 = vpack.c.b16 %v1113, %v1106
    %v1359 = vpack.c.b16 %v1114, %v1107
    %v1360 = vpack.c.b16 %v1115, %v1108
    %v1361 = vpack.c.b16 %v1116, %v1109
    %v1362 = vpack.c.b16 %v1117, %v1110
    %v1363 = vpack.c.b16 %v1118, %v1111
    %v1364 = vpack.c.b16 %v1119, %v1112
    %v1365 = vpack.c.b16 %v1127, %v1120
    %v1366 = vpack.c.b16 %v1128, %v1121
    %v1367 = vpack.c.b16 %v1129, %v1122
    %v1368 = vpack.c.b16 %v1130, %v1123
    %v1369 = vpack.c.b16 %v1131, %v1124
    %v1370 = vpack.c.b16 %v1132, %v1125
    %v1371 = vpack.c.b16 %v1133, %v1126
    %v1372 = vpack.c.b16 %v1141, %v1134
    %v1373 = vpack.c.b16 %v1142, %v1135
    %v1374 = vpack.c.b16 %v1143, %v1136
    %v1375 = vpack.c.b16 %v1144, %v1137
    %v1376 = vpack.c.b16 %v1145, %v1138
    %v1377 = vpack.c.b16 %v1146, %v1139
    %v1378 = vpack.c.b16 %v1147, %v1140
    %v1379 = vpack.c.b16 %v1155, %v1148
    %v1380 = vpack.c.b16 %v1156, %v1149
    %v1381 = vpack.c.b16 %v1157, %v1150
    %v1382 = vpack.c.b16 %v1158, %v1151
    %v1383 = vpack.c.b16 %v1159, %v1152
    %v1384 = vpack.c.b16 %v1160, %v1153
    %v1385 = vpack.c.b16 %v1161, %v1154
    %1610 = vmatprep.subr.bf16.mxu0 %v1163
    %1611 = vmatpush1.bf16.msra.mxu0 %v1162
    %1612 = vmatprep.subr.bf16.mxu0 %v1170
    %1613 = vmatpush1.bf16.msra.mxu0 %v1169
    %1614 = vmatprep.subr.bf16.mxu0 %v1177
    %1615 = vmatpush1.bf16.msra.mxu0 %v1176
    %1616 = vmatprep.subr.bf16.mxu0 %v1184
    %1617 = vmatpush1.bf16.msra.mxu0 %v1183
    %1618 = vmatprep.subr.bf16.mxu0 %v1191
    %1619 = vmatpush1.bf16.msra.mxu0 %v1190
    %1620 = vmatprep.subr.bf16.mxu0 %v1198
    %1621 = vmatpush1.bf16.msra.mxu0 %v1197
    %1622 = vmatprep.subr.bf16.mxu0 %v1205
    %1623 = vmatpush1.bf16.msra.mxu0 %v1204
    %1624 = vmatprep.subr.bf16.mxu0 %v1212
    %1625 = vmatpush1.bf16.msra.mxu0 %v1211
    %1626 = vmatprep.subr.bf16.mxu0 %v1219
    %1627 = vmatpush1.bf16.msra.mxu0 %v1218
    %1628 = vmatprep.subr.bf16.mxu0 %v1226
    %1629 = vmatpush1.bf16.msra.mxu0 %v1225
    %1630 = vmatprep.subr.bf16.mxu0 %v1233
    %1631 = vmatpush1.bf16.msra.mxu0 %v1232
    %1632 = vmatprep.subr.bf16.mxu0 %v1240
    %1633 = vmatpush1.bf16.msra.mxu0 %v1239
    %1634 = vmatprep.subr.bf16.mxu0 %v1247
    %1635 = vmatpush1.bf16.msra.mxu0 %v1246
    %1636 = vmatprep.subr.bf16.mxu0 %v1254
    %1637 = vmatpush1.bf16.msra.mxu0 %v1253
    %1638 = vmatprep.subr.bf16.mxu0 %v1261
    %1639 = vmatpush1.bf16.msra.mxu0 %v1260
    %1640 = vmatprep.subr.bf16.mxu0 %v1268
    %1641 = vmatpush1.bf16.msra.mxu0 %v1267
    %1642 = vmatprep.mubr.bf16.mxu0 %v162
    %1643 = vmatmul.mubr.bf16.gmra.mrb[0].mxu0 %v161
    %v1644 = vpop.f32.mrb[0].mxu0
    %v1645 = vadd.f32 %v426, %v1644
    %v1646 = vpop.f32.mrb[0].mxu0
    %v1647 = vadd.f32 %v430, %v1646
    %v1648 = vpop.f32.mrb[0].mxu0
    %v1649 = vpop.f32.mrb[0].mxu0
    %1650 = vdwg.mxu0
    %1651 = vmatprep.subr.bf16.mxu0 %v1275
    %1652 = vmatpush1.bf16.msra.mxu0 %v1274
    %1653 = vmatprep.subr.bf16.mxu0 %v1282
    %1654 = vmatpush1.bf16.msra.mxu0 %v1281
    %1655 = vmatprep.subr.bf16.mxu0 %v1289
    %1656 = vmatpush1.bf16.msra.mxu0 %v1288
    %1657 = vmatprep.subr.bf16.mxu0 %v1296
    %1658 = vmatpush1.bf16.msra.mxu0 %v1295
    %1659 = vmatprep.subr.bf16.mxu0 %v1303
    %1660 = vmatpush1.bf16.msra.mxu0 %v1302
    %1661 = vmatprep.subr.bf16.mxu0 %v1310
    %1662 = vmatpush1.bf16.msra.mxu0 %v1309
    %1663 = vmatprep.subr.bf16.mxu0 %v1317
    %1664 = vmatpush1.bf16.msra.mxu0 %v1316
    %1665 = vmatprep.subr.bf16.mxu0 %v1324
    %1666 = vmatpush1.bf16.msra.mxu0 %v1323
    %1667 = vmatprep.subr.bf16.mxu0 %v1331
    %1668 = vmatpush1.bf16.msra.mxu0 %v1330
    %1669 = vmatprep.subr.bf16.mxu0 %v1338
    %1670 = vmatpush1.bf16.msra.mxu0 %v1337
    %1671 = vmatprep.subr.bf16.mxu0 %v1345
    %1672 = vmatpush1.bf16.msra.mxu0 %v1344
    %1673 = vmatprep.subr.bf16.mxu0 %v1352
    %1674 = vmatpush1.bf16.msra.mxu0 %v1351
    %1675 = vmatprep.subr.bf16.mxu0 %v1359
    %1676 = vmatpush1.bf16.msra.mxu0 %v1358
    %1677 = vmatprep.subr.bf16.mxu0 %v1366
    %1678 = vmatpush1.bf16.msra.mxu0 %v1365
    %1679 = vmatprep.subr.bf16.mxu0 %v1373
    %1680 = vmatpush1.bf16.msra.mxu0 %v1372
    %1681 = vmatprep.subr.bf16.mxu0 %v1380
    %1682 = vmatpush1.bf16.msra.mxu0 %v1379
    %1683 = vmatprep.mubr.bf16.mxu0 %v164
    %1684 = vmatmul.mubr.bf16.gmra.mrb[0].mxu0 %v163
    %v1685 = vpop.f32.mrb[0].mxu0
    %v1686 = vadd.f32 %v1645, %v1685
    %v1687 = vpop.f32.mrb[0].mxu0
    %v1688 = vadd.f32 %v1647, %v1687
    %v1689 = vpop.f32.mrb[0].mxu0
    %v1690 = vpop.f32.mrb[0].mxu0
    %1691 = vdwg.mxu0
    %1692 = vmatprep.subr.bf16.mxu0 %v1165
    %1693 = vmatpush1.bf16.msra.mxu0 %v1164
    %1694 = vmatprep.subr.bf16.mxu0 %v1172
    %1695 = vmatpush1.bf16.msra.mxu0 %v1171
    %1696 = vmatprep.subr.bf16.mxu0 %v1179
    %1697 = vmatpush1.bf16.msra.mxu0 %v1178
    %1698 = vmatprep.subr.bf16.mxu0 %v1186
    %1699 = vmatpush1.bf16.msra.mxu0 %v1185
    %1700 = vmatprep.subr.bf16.mxu0 %v1193
    %1701 = vmatpush1.bf16.msra.mxu0 %v1192
    %1702 = vmatprep.subr.bf16.mxu0 %v1200
    %1703 = vmatpush1.bf16.msra.mxu0 %v1199
    %1704 = vmatprep.subr.bf16.mxu0 %v1207
    %1705 = vmatpush1.bf16.msra.mxu0 %v1206
    %1706 = vmatprep.subr.bf16.mxu0 %v1214
    %1707 = vmatpush1.bf16.msra.mxu0 %v1213
    %1708 = vmatprep.subr.bf16.mxu0 %v1221
    %1709 = vmatpush1.bf16.msra.mxu0 %v1220
    %1710 = vmatprep.subr.bf16.mxu0 %v1228
    %1711 = vmatpush1.bf16.msra.mxu0 %v1227
    %1712 = vmatprep.subr.bf16.mxu0 %v1235
    %1713 = vmatpush1.bf16.msra.mxu0 %v1234
    %1714 = vmatprep.subr.bf16.mxu0 %v1242
    %1715 = vmatpush1.bf16.msra.mxu0 %v1241
    %1716 = vmatprep.subr.bf16.mxu0 %v1249
    %1717 = vmatpush1.bf16.msra.mxu0 %v1248
    %1718 = vmatprep.subr.bf16.mxu0 %v1256
    %1719 = vmatpush1.bf16.msra.mxu0 %v1255
    %1720 = vmatprep.subr.bf16.mxu0 %v1263
    %1721 = vmatpush1.bf16.msra.mxu0 %v1262
    %1722 = vmatprep.subr.bf16.mxu0 %v1270
    %1723 = vmatpush1.bf16.msra.mxu0 %v1269
    %1724 = vmatprep.mubr.bf16.mxu0 %v162
    %1725 = vmatmul.mubr.bf16.gmra.mrb[0].mxu0 %v161
    %v1726 = vpop.f32.mrb[0].mxu0
    %v1727 = vadd.f32 %v434, %v1726
    %v1728 = vpop.f32.mrb[0].mxu0
    %v1729 = vadd.f32 %v438, %v1728
    %v1730 = vpop.f32.mrb[0].mxu0
    %v1731 = vpop.f32.mrb[0].mxu0
    %1732 = vdwg.mxu0
    %1733 = vmatprep.subr.bf16.mxu0 %v1277
    %1734 = vmatpush1.bf16.msra.mxu0 %v1276
    %1735 = vmatprep.subr.bf16.mxu0 %v1284
    %1736 = vmatpush1.bf16.msra.mxu0 %v1283
    %1737 = vmatprep.subr.bf16.mxu0 %v1291
    %1738 = vmatpush1.bf16.msra.mxu0 %v1290
    %1739 = vmatprep.subr.bf16.mxu0 %v1298
    %1740 = vmatpush1.bf16.msra.mxu0 %v1297
    %1741 = vmatprep.subr.bf16.mxu0 %v1305
    %1742 = vmatpush1.bf16.msra.mxu0 %v1304
    %1743 = vmatprep.subr.bf16.mxu0 %v1312
    %1744 = vmatpush1.bf16.msra.mxu0 %v1311
    %1745 = vmatprep.subr.bf16.mxu0 %v1319
    %1746 = vmatpush1.bf16.msra.mxu0 %v1318
    %1747 = vmatprep.subr.bf16.mxu0 %v1326
    %1748 = vmatpush1.bf16.msra.mxu0 %v1325
    %1749 = vmatprep.subr.bf16.mxu0 %v1333
    %1750 = vmatpush1.bf16.msra.mxu0 %v1332
    %1751 = vmatprep.subr.bf16.mxu0 %v1340
    %1752 = vmatpush1.bf16.msra.mxu0 %v1339
    %1753 = vmatprep.subr.bf16.mxu0 %v1347
    %1754 = vmatpush1.bf16.msra.mxu0 %v1346
    %1755 = vmatprep.subr.bf16.mxu0 %v1354
    %1756 = vmatpush1.bf16.msra.mxu0 %v1353
    %1757 = vmatprep.subr.bf16.mxu0 %v1361
    %1758 = vmatpush1.bf16.msra.mxu0 %v1360
    %1759 = vmatprep.subr.bf16.mxu0 %v1368
    %1760 = vmatpush1.bf16.msra.mxu0 %v1367
    %1761 = vmatprep.subr.bf16.mxu0 %v1375
    %1762 = vmatpush1.bf16.msra.mxu0 %v1374
    %1763 = vmatprep.subr.bf16.mxu0 %v1382
    %1764 = vmatpush1.bf16.msra.mxu0 %v1381
    %1765 = vmatprep.mubr.bf16.mxu0 %v164
    %1766 = vmatmul.mubr.bf16.gmra.mrb[0].mxu0 %v163
    %v1767 = vpop.f32.mrb[0].mxu0
    %v1768 = vadd.f32 %v1727, %v1767
    %v1769 = vpop.f32.mrb[0].mxu0
    %v1770 = vadd.f32 %v1729, %v1769
    %v1771 = vpop.f32.mrb[0].mxu0
    %v1772 = vpop.f32.mrb[0].mxu0
    %1773 = vdwg.mxu0
    %1774 = vmatprep.subr.bf16.mxu0 %v1167
    %1775 = vmatpush1.bf16.msra.mxu0 %v1166
    %1776 = vmatprep.subr.bf16.mxu0 %v1174
    %1777 = vmatpush1.bf16.msra.mxu0 %v1173
    %1778 = vmatprep.subr.bf16.mxu0 %v1181
    %1779 = vmatpush1.bf16.msra.mxu0 %v1180
    %1780 = vmatprep.subr.bf16.mxu0 %v1188
    %1781 = vmatpush1.bf16.msra.mxu0 %v1187
    %1782 = vmatprep.subr.bf16.mxu0 %v1195
    %1783 = vmatpush1.bf16.msra.mxu0 %v1194
    %1784 = vmatprep.subr.bf16.mxu0 %v1202
    %1785 = vmatpush1.bf16.msra.mxu0 %v1201
    %1786 = vmatprep.subr.bf16.mxu0 %v1209
    %1787 = vmatpush1.bf16.msra.mxu0 %v1208
    %1788 = vmatprep.subr.bf16.mxu0 %v1216
    %1789 = vmatpush1.bf16.msra.mxu0 %v1215
    %1790 = vmatprep.subr.bf16.mxu0 %v1223
    %1791 = vmatpush1.bf16.msra.mxu0 %v1222
    %1792 = vmatprep.subr.bf16.mxu0 %v1230
    %1793 = vmatpush1.bf16.msra.mxu0 %v1229
    %1794 = vmatprep.subr.bf16.mxu0 %v1237
    %1795 = vmatpush1.bf16.msra.mxu0 %v1236
    %1796 = vmatprep.subr.bf16.mxu0 %v1244
    %1797 = vmatpush1.bf16.msra.mxu0 %v1243
    %1798 = vmatprep.subr.bf16.mxu0 %v1251
    %1799 = vmatpush1.bf16.msra.mxu0 %v1250
    %1800 = vmatprep.subr.bf16.mxu0 %v1258
    %1801 = vmatpush1.bf16.msra.mxu0 %v1257
    %1802 = vmatprep.subr.bf16.mxu0 %v1265
    %1803 = vmatpush1.bf16.msra.mxu0 %v1264
    %1804 = vmatprep.subr.bf16.mxu0 %v1272
    %1805 = vmatpush1.bf16.msra.mxu0 %v1271
    %1806 = vmatprep.mubr.bf16.mxu0 %v162
    %1807 = vmatmul.mubr.bf16.gmra.mrb[0].mxu0 %v161
    %v1808 = vpop.f32.mrb[0].mxu0
    %v1809 = vadd.f32 %v442, %v1808
    %v1810 = vpop.f32.mrb[0].mxu0
    %v1811 = vadd.f32 %v446, %v1810
    %v1812 = vpop.f32.mrb[0].mxu0
    %v1813 = vpop.f32.mrb[0].mxu0
    %1814 = vdwg.mxu0
    %1815 = vmatprep.subr.bf16.mxu0 %v1279
    %1816 = vmatpush1.bf16.msra.mxu0 %v1278
    %1817 = vmatprep.subr.bf16.mxu0 %v1286
    %1818 = vmatpush1.bf16.msra.mxu0 %v1285
    %1819 = vmatprep.subr.bf16.mxu0 %v1293
    %1820 = vmatpush1.bf16.msra.mxu0 %v1292
    %1821 = vmatprep.subr.bf16.mxu0 %v1300
    %1822 = vmatpush1.bf16.msra.mxu0 %v1299
    %1823 = vmatprep.subr.bf16.mxu0 %v1307
    %1824 = vmatpush1.bf16.msra.mxu0 %v1306
    %1825 = vmatprep.subr.bf16.mxu0 %v1314
    %1826 = vmatpush1.bf16.msra.mxu0 %v1313
    %1827 = vmatprep.subr.bf16.mxu0 %v1321
    %1828 = vmatpush1.bf16.msra.mxu0 %v1320
    %1829 = vmatprep.subr.bf16.mxu0 %v1328
    %1830 = vmatpush1.bf16.msra.mxu0 %v1327
    %1831 = vmatprep.subr.bf16.mxu0 %v1335
    %1832 = vmatpush1.bf16.msra.mxu0 %v1334
    %1833 = vmatprep.subr.bf16.mxu0 %v1342
    %1834 = vmatpush1.bf16.msra.mxu0 %v1341
    %1835 = vmatprep.subr.bf16.mxu0 %v1349
    %1836 = vmatpush1.bf16.msra.mxu0 %v1348
    %1837 = vmatprep.subr.bf16.mxu0 %v1356
    %1838 = vmatpush1.bf16.msra.mxu0 %v1355
    %1839 = vmatprep.subr.bf16.mxu0 %v1363
    %1840 = vmatpush1.bf16.msra.mxu0 %v1362
    %1841 = vmatprep.subr.bf16.mxu0 %v1370
    %1842 = vmatpush1.bf16.msra.mxu0 %v1369
    %1843 = vmatprep.subr.bf16.mxu0 %v1377
    %1844 = vmatpush1.bf16.msra.mxu0 %v1376
    %1845 = vmatprep.subr.bf16.mxu0 %v1384
    %1846 = vmatpush1.bf16.msra.mxu0 %v1383
    %1847 = vmatprep.mubr.bf16.mxu0 %v164
    %1848 = vmatmul.mubr.bf16.gmra.mrb[0].mxu0 %v163
    %v1849 = vpop.f32.mrb[0].mxu0
    %v1850 = vadd.f32 %v1809, %v1849
    %v1851 = vpop.f32.mrb[0].mxu0
    %v1852 = vadd.f32 %v1811, %v1851
    %v1853 = vpop.f32.mrb[0].mxu0
    %v1854 = vpop.f32.mrb[0].mxu0
    %1855 = vdwg.mxu0
    %1856 = vmatprep.subr.bf16.mxu0 0
    %1857 = vmatpush1.bf16.msra.mxu0 %v1168
    %1858 = vmatprep.subr.bf16.mxu0 0
    %1859 = vmatpush1.bf16.msra.mxu0 %v1175
    %1860 = vmatprep.subr.bf16.mxu0 0
    %1861 = vmatpush1.bf16.msra.mxu0 %v1182
    %1862 = vmatprep.subr.bf16.mxu0 0
    %1863 = vmatpush1.bf16.msra.mxu0 %v1189
    %1864 = vmatprep.subr.bf16.mxu0 0
    %1865 = vmatpush1.bf16.msra.mxu0 %v1196
    %1866 = vmatprep.subr.bf16.mxu0 0
    %1867 = vmatpush1.bf16.msra.mxu0 %v1203
    %1868 = vmatprep.subr.bf16.mxu0 0
    %1869 = vmatpush1.bf16.msra.mxu0 %v1210
    %1870 = vmatprep.subr.bf16.mxu0 0
    %1871 = vmatpush1.bf16.msra.mxu0 %v1217
    %1872 = vmatprep.subr.bf16.mxu0 0
    %1873 = vmatpush1.bf16.msra.mxu0 %v1224
    %1874 = vmatprep.subr.bf16.mxu0 0
    %1875 = vmatpush1.bf16.msra.mxu0 %v1231
    %1876 = vmatprep.subr.bf16.mxu0 0
    %1877 = vmatpush1.bf16.msra.mxu0 %v1238
    %1878 = vmatprep.subr.bf16.mxu0 0
    %1879 = vmatpush1.bf16.msra.mxu0 %v1245
    %1880 = vmatprep.subr.bf16.mxu0 0
    %1881 = vmatpush1.bf16.msra.mxu0 %v1252
    %1882 = vmatprep.subr.bf16.mxu0 0
    %1883 = vmatpush1.bf16.msra.mxu0 %v1259
    %1884 = vmatprep.subr.bf16.mxu0 0
    %1885 = vmatpush1.bf16.msra.mxu0 %v1266
    %1886 = vmatprep.subr.bf16.mxu0 0
    %1887 = vmatpush1.bf16.msra.mxu0 %v1273
    %1888 = vmatprep.mubr.bf16.mxu0 %v162
    %1889 = vmatmul.mubr.bf16.gmra.mrb[0].mxu0 %v161
    %v1890 = vpop.f32.mrb[0].mxu0
    %v1891 = vadd.f32 %v450, %v1890
    %v1892 = vpop.f32.mrb[0].mxu0
    %v1893 = vpop.f32.mrb[0].mxu0
    %v1894 = vpop.f32.mrb[0].mxu0
    %1895 = vdwg.mxu0
    %1896 = vmatprep.subr.bf16.mxu0 0
    %1897 = vmatpush1.bf16.msra.mxu0 %v1280
    %1898 = vmatprep.subr.bf16.mxu0 0
    %1899 = vmatpush1.bf16.msra.mxu0 %v1287
    %1900 = vmatprep.subr.bf16.mxu0 0
    %1901 = vmatpush1.bf16.msra.mxu0 %v1294
    %1902 = vmatprep.subr.bf16.mxu0 0
    %1903 = vmatpush1.bf16.msra.mxu0 %v1301
    %1904 = vmatprep.subr.bf16.mxu0 0
    %1905 = vmatpush1.bf16.msra.mxu0 %v1308
    %1906 = vmatprep.subr.bf16.mxu0 0
    %1907 = vmatpush1.bf16.msra.mxu0 %v1315
    %1908 = vmatprep.subr.bf16.mxu0 0
    %1909 = vmatpush1.bf16.msra.mxu0 %v1322
    %1910 = vmatprep.subr.bf16.mxu0 0
    %1911 = vmatpush1.bf16.msra.mxu0 %v1329
    %1912 = vmatprep.subr.bf16.mxu0 0
    %1913 = vmatpush1.bf16.msra.mxu0 %v1336
    %1914 = vmatprep.subr.bf16.mxu0 0
    %1915 = vmatpush1.bf16.msra.mxu0 %v1343
    %1916 = vmatprep.subr.bf16.mxu0 0
    %1917 = vmatpush1.bf16.msra.mxu0 %v1350
    %1918 = vmatprep.subr.bf16.mxu0 0
    %1919 = vmatpush1.bf16.msra.mxu0 %v1357
    %1920 = vmatprep.subr.bf16.mxu0 0
    %1921 = vmatpush1.bf16.msra.mxu0 %v1364
    %1922 = vmatprep.subr.bf16.mxu0 0
    %1923 = vmatpush1.bf16.msra.mxu0 %v1371
    %1924 = vmatprep.subr.bf16.mxu0 0
    %1925 = vmatpush1.bf16.msra.mxu0 %v1378
    %1926 = vmatprep.subr.bf16.mxu0 0
    %1927 = vmatpush1.bf16.msra.mxu0 %v1385
    %1928 = vmatprep.mubr.bf16.mxu0 %v164
    %1929 = vmatmul.mubr.bf16.gmra.mrb[0].mxu0 %v163
    %v1930 = vpop.f32.mrb[0].mxu0
    %v1931 = vadd.f32 %v1891, %v1930
    %v1932 = vpop.f32.mrb[0].mxu0
    %v1933 = vpop.f32.mrb[0].mxu0
    %v1934 = vpop.f32.mrb[0].mxu0
    %1935 = vdwg.mxu0
    %v1936 = vmax.f32 %v1686, -30.0
    %v1937 = vmax.f32 %v1688, -30.0
    %v1938 = vmax.f32 %v1768, -30.0
    %v1939 = vmax.f32 %v1770, -30.0
    %v1940 = vmax.f32 %v1850, -30.0
    %v1941 = vmax.f32 %v1852, -30.0
    %v1942 = vmax.f32 %v1931, -30.0
    %v1943 = vmin.f32 %v1936, 30.0
    %v1944 = vmin.f32 %v1937, 30.0
    %v1945 = vmin.f32 %v1938, 30.0
    %v1946 = vmin.f32 %v1939, 30.0
    %v1947 = vmin.f32 %v1940, 30.0
    %v1948 = vmin.f32 %v1941, 30.0
    %v1949 = vmin.f32 %v1942, 30.0
    %v1950 = vsub.f32 0.0, %v1943
    %v1951 = vsub.f32 0.0, %v1944
    %v1952 = vsub.f32 0.0, %v1945
    %v1953 = vsub.f32 0.0, %v1946
    %v1954 = vsub.f32 0.0, %v1947
    %v1955 = vsub.f32 0.0, %v1948
    %v1956 = vsub.f32 0.0, %v1949
    %v1957 = vmul.f32 %v1950, 1.442695
    %v1958 = vpow.pop %v1957
    %v1959 = vmul.f32 %v1951, 1.442695
    %v1960 = vpow.pop %v1959
    %v1961 = vmul.f32 %v1952, 1.442695
    %v1962 = vpow.pop %v1961
    %v1963 = vmul.f32 %v1953, 1.442695
    %v1964 = vpow.pop %v1963
    %v1965 = vmul.f32 %v1954, 1.442695
    %v1966 = vpow.pop %v1965
    %v1967 = vmul.f32 %v1955, 1.442695
    %v1968 = vpow.pop %v1967
    %v1969 = vmul.f32 %v1956, 1.442695
    %v1970 = vpow.pop %v1969
    %v1971 = vadd.f32 %v1958, 1.0
    %v1972 = vadd.f32 %v1960, 1.0
    %v1973 = vadd.f32 %v1962, 1.0
    %v1974 = vadd.f32 %v1964, 1.0
    %v1975 = vadd.f32 %v1966, 1.0
    %v1976 = vadd.f32 %v1968, 1.0
    %v1977 = vadd.f32 %v1970, 1.0
    %v1978 = vrcp.pop %v1971
    %v1979 = vrcp.pop %v1972
    %v1980 = vrcp.pop %v1973
    %v1981 = vrcp.pop %v1974
    %v1982 = vrcp.pop %v1975
    %v1983 = vrcp.pop %v1976
    %v1984 = vrcp.pop %v1977
    %1985 = vst [vmem:[#allocation2] sm:$0xff] %v1978
    %1986 = vst [vmem:[#allocation2 + $0x8] sm:$0xff] %v1979
    %1987 = vst [vmem:[#allocation2 + $0x10] sm:$0xff] %v1980
    %1988 = vst [vmem:[#allocation2 + $0x18] sm:$0xff] %v1981
    %1989 = vst [vmem:[#allocation2 + $0x20] sm:$0xff] %v1982
    %1990 = vst [vmem:[#allocation2 + $0x28] sm:$0xff] %v1983
    %vm1991 = vcmask 130048
    %1992 = vst.msk [vmem:[#allocation2 + $0x30] sm:$0xff] %vm1991, %v1984
    // Predicated region
    $region22: #{tpu_custom_call.1} parent=1 // pred_check
      _
    $region23: #{tpu_custom_call.1} parent=1 // pred_check_branch
      %1994 = sbr.rel (0) target = $region25
    $region24: #{tpu_custom_call.1} parent=1 // pred_region
      %s1996 = ssub.s32 896, 896
      %1997 = vsyncadd [#allocation3], %s1996
      %s1999 = sshll.u32 [#allocation2], 4
      %s2000 = int_to_ptr.vmem [resolvable:$true] %s1999
      %2002 = dma.vmem_to_hbm [thread:$0]  %s2000, 896, %s5, [#allocation3]
    $region25: #{tpu_custom_call.1} parent=1 // pred_fallthru
      _
    // Predicated region
    $region26: #{tpu_custom_call.1} parent=1 // pred_check
      _
    $region27: #{tpu_custom_call.1} parent=1 // pred_check_branch
      %2004 = sbr.rel (0) target = $region29
    $region28: #{tpu_custom_call.1} parent=1 // pred_region
      %2005 = dma.done [#allocation3], 896
    $region29: #{tpu_custom_call.1} parent=1 // pred_fallthru
      _
    %2006 = vsyncpa [#allocation3], 1

</llo_original>
